<compile_context>
chip_gen: v6e
topology: v6e:2x2x1
jax: 0.10.0
libtpu: 0.0.40
codegen_flags: <defaults>
</compile_context>

<pallas_src>
import functools

import jax
import jax.numpy as jnp
from jax import lax
from jax.experimental import pallas as pl
from jax.experimental.pallas import tpu as pltpu


_MASK_VALUE = -1e30  # finite "minus infinity" for the causal mask


def _layernorm(x, gamma, beta, eps=1e-5):
    # f32 elementwise; rsqrt runs on the EUP instead of a multi-cycle divide.
    mean = jnp.mean(x, axis=-1, keepdims=True)
    var = jnp.mean((x - mean) ** 2, axis=-1, keepdims=True)  # unbiased=False
    return (x - mean) * lax.rsqrt(var + eps) * gamma + beta


def _gelu_tanh(x):
    c = jnp.sqrt(jnp.asarray(2.0 / jnp.pi, dtype=x.dtype))
    return 0.5 * x * (1.0 + jnp.tanh(c * (x + 0.044715 * x * x * x)))


def transformer_block_kernel(
    x_ref,                     # (1, T, E)   f32
    wqkv_ref,                  # (E, 3E)     fused [Wq | Wk | Wv], compute dtype
    wo_ref, bo_ref,            # (E, E) cdt, (1, E) f32
    g1_ref, s1_ref,            # LN1 scale/shift (1, E) f32
    g2_ref, s2_ref,            # LN2 scale/shift (1, E) f32
    w1_ref, b1_ref,            # (E, H) cdt, (1, H) f32
    w2_ref, b2_ref,            # (H, E) cdt, (1, E) f32
    o_ref,                     # (1, T, E)
    ctx_ref,                   # VMEM scratch (T, E) cdt: attention context
    *, num_heads, q_tile, ff_chunk, act_dtype,
):
    cdt = wqkv_ref.dtype                       # MXU operand dtype (f32 or bf16)
    x = x_ref[0].astype(jnp.float32)           # (T, E)
    T, E = x.shape
    head_dim = E // num_heads
    scale = 1.0 / float(head_dim) ** 0.5

    # ---- LayerNorm 1 (f32) ----
    h = _layernorm(x, g1_ref[0], s1_ref[0])    # (T, E)

    # ---- Fused QKV projection: one wide (T,E)x(E,3E) MXU matmul ----
    qkv = jnp.dot(h.astype(cdt), wqkv_ref[...],
                  preferred_element_type=jnp.float32)        # (T, 3E) f32

    # Single relayout to a heads-leading layout (no per-head slice/stack).
    def to_heads(y):                            # (T, E) -> (NH, T, hd)
        return jnp.transpose(
            y.astype(cdt).reshape(T, num_heads, head_dim), (1, 0, 2))

    qh = to_heads(qkv[:, :E] * scale)           # fold 1/sqrt(hd) into q (f32)
    kh = to_heads(qkv[:, E:2 * E])
    vh = to_heads(qkv[:, 2 * E:])

    # ---- Causal attention, tiled over query blocks ----
    # Per tile only K/V[:kv_len] is touched (skips KV above the diagonal) and
    # the live score tensor is capped at (NH, Tq, kv_len) instead of (NH,T,T).
    n_q = T // q_tile
    for qt in range(n_q):                       # static; tile state dies at the scratch store
        q0 = qt * q_tile
        kv_len = q0 + q_tile                    # static (causal truncation)
        q_t = qh[:, q0:q0 + q_tile, :]          # (NH, Tq, hd)
        k_s = kh[:, :kv_len, :]                 # (NH, kv, hd)
        v_s = vh[:, :kv_len, :]

        s = jnp.einsum("hqd,hkd->hqk", q_t, k_s,
                       preferred_element_type=jnp.float32)   # (NH, Tq, kv) f32
        rows = lax.broadcasted_iota(jnp.int32, (q_tile, kv_len), 0) + q0
        cols = lax.broadcasted_iota(jnp.int32, (q_tile, kv_len), 1)
        s = jnp.where((cols > rows)[None, :, :], _MASK_VALUE, s)

        # Numerically-safe softmax; reciprocal goes to the EUP.
        m = jnp.max(s, axis=-1, keepdims=True)
        p = jnp.exp(s - m)
        denom = jnp.sum(p, axis=-1, keepdims=True)
        probs = p * pl.reciprocal(denom, approx=True)        # f32

        ctx_t = jnp.einsum("hqk,hkd->hqd", probs.astype(cdt), v_s,
                           preferred_element_type=jnp.float32)  # (NH, Tq, hd)
        merged = jnp.transpose(ctx_t, (1, 0, 2)).reshape(q_tile, E)
        ctx_ref[q0:q0 + q_tile, :] = merged.astype(cdt)

    attn = jnp.dot(ctx_ref[...], wo_ref[...],
                   preferred_element_type=jnp.float32) + bo_ref[0]

    # dropout (attention / resid) is identity in eval mode
    x1 = x + attn                                             # residual 1

    # ---- LayerNorm 2 + FeedForward (hidden dim in ff_chunk panels) ----
    h2 = _layernorm(x1, g2_ref[0], s2_ref[0]).astype(cdt)     # (T, E)
    H = w1_ref.shape[1]
    n_chunks = H // ff_chunk

    if n_chunks == 1:
        a = jnp.dot(h2, w1_ref[...], preferred_element_type=jnp.float32)
        a = _gelu_tanh((a + b1_ref[0]).astype(act_dtype))
        ff = jnp.dot(a.astype(cdt), w2_ref[...],
                     preferred_element_type=jnp.float32)
    else:
        def body(c, acc):
            start = pl.multiple_of(c * ff_chunk, ff_chunk)
            a = jnp.dot(h2, w1_ref[:, pl.ds(start, ff_chunk)],
                        preferred_element_type=jnp.float32)   # (T, ff_chunk)
            a = a + b1_ref[:, pl.ds(start, ff_chunk)]
            a = _gelu_tanh(a.astype(act_dtype))
            return acc + jnp.dot(a.astype(cdt), w2_ref[pl.ds(start, ff_chunk), :],
                                 preferred_element_type=jnp.float32)
        ff = lax.fori_loop(0, n_chunks, body, jnp.zeros((T, E), jnp.float32),
                           unroll=(n_chunks <= 4))

    out = x1 + ff + b2_ref[0]                                 # residual 2
    o_ref[0] = out.astype(o_ref.dtype)


def transformer_block(x, params, num_heads, *, use_bf16_matmul=True,
                      q_tile=None, ff_chunk=None):
    B, T, E = x.shape
    H = params["w1"].shape[1]

    # ---- per-generation knobs ----
    vmem_cap = 64 * 1024 * 1024
    try:
        vmem_cap = int(getattr(pltpu.get_tpu_info(), "vmem_capacity_bytes",
                               vmem_cap))
    except Exception:
        pass
    # ~80% of physical VMEM: ~102 MiB on v5e/v6e (128 MiB), ~51 MiB on v7x (64 MiB).
    vmem_limit = min(int(vmem_cap * 0.8), 110 * 1024 * 1024)

    try:
        device_kind = jax.devices()[0].device_kind.lower()
    except Exception:
        device_kind = ""
    is_v5 = "v5" in device_kind

    cdt = jnp.bfloat16 if use_bf16_matmul else jnp.float32
    # bf16 GELU only where the VPU/EUP natively support bf16 (v6e/v7x).
    act_dtype = cdt if (use_bf16_matmul and not is_v5) else jnp.float32

    # Query-tile size: prefer 256-multiples (v6e/v7x MXU is 2x256^2).
    if q_tile is None:
        q_tile = T
        for t in (512, 256, 128):
            if T > t and T % t == 0:
                q_tile = t
                break
    if T % q_tile != 0 or q_tile > T:
        q_tile = T

    # FFN panel width: prefer 256-multiples, cap the (T, ff_chunk) intermediate.
    if ff_chunk is None:
        ff_chunk = H
        for c in (2048, 1024, 512, 256):
            if H > c and H % c == 0:
                ff_chunk = c
                break
    if H % ff_chunk != 0:
        ff_chunk = H

    # Fuse Q/K/V into one (E, 3E) matrix and cast MXU operands once, outside
    # the kernel (halves weight DMA/VMEM bytes in the bf16 path).
    wqkv = jnp.concatenate(
        [params["wq"], params["wk"], params["wv"]], axis=1).astype(cdt)
    wo = params["wo"].astype(cdt)
    w1 = params["w1"].astype(cdt)
    w2 = params["w2"].astype(cdt)

    def const_spec(shape, single_buffer=False):
        nd = len(shape)
        index_map = lambda b, _nd=nd: (0,) * _nd
        if single_buffer:
            # Grid-invariant weight: double-buffering is pure VMEM waste.
            return pl.BlockSpec(shape, index_map, pipeline_mode=pl.Buffered(1))
        return pl.BlockSpec(shape, index_map)

    kernel = functools.partial(
        transformer_block_kernel,
        num_heads=num_heads, q_tile=q_tile, ff_chunk=ff_chunk,
        act_dtype=act_dtype)

    return pl.pallas_call(
        kernel,
        out_shape=jax.ShapeDtypeStruct((B, T, E), x.dtype),
        grid=(B,),
        in_specs=[
            pl.BlockSpec((1, T, E), lambda b: (b, 0, 0)),       # x
            const_spec((E, 3 * E), single_buffer=True),         # wqkv (fused)
            const_spec((E, E), single_buffer=True),              # wo
            const_spec((1, E)),                                   # bo
            const_spec((1, E)),                                   # g1
            const_spec((1, E)),                                   # s1
            const_spec((1, E)),                                   # g2
            const_spec((1, E)),                                   # s2
            const_spec((E, H), single_buffer=True),               # w1
            const_spec((1, H)),                                    # b1
            const_spec((H, E), single_buffer=True),                # w2
            const_spec((1, E)),                                     # b2
        ],
        out_specs=pl.BlockSpec((1, T, E), lambda b: (b, 0, 0)),
        scratch_shapes=[pltpu.VMEM((T, E), cdt)],                  # attention ctx
        compiler_params=pltpu.CompilerParams(
            dimension_semantics=("parallel",),
            vmem_limit_bytes=vmem_limit,
        ),
    )(
        x,
        wqkv, wo, params["bo"],
        params["g1"], params["s1"], params["g2"], params["s2"],
        w1, params["b1"], w2, params["b2"],
    )


def transformer_block_ref(x, params, num_heads):
    """Pure-JAX f32 reference with identical semantics (for verification)."""
    B, T, E = x.shape
    head_dim = E // num_heads

    def ln(v, g, b):
        m = jnp.mean(v, axis=-1, keepdims=True)
        var = jnp.mean((v - m) ** 2, axis=-1, keepdims=True)
        return g * (v - m) / jnp.sqrt(var + 1e-5) + b

    h = ln(x, params["g1"][0], params["s1"][0])
    q = h @ params["wq"]
    k = h @ params["wk"]
    v = h @ params["wv"]
    q = q.reshape(B, T, num_heads, head_dim).transpose(0, 2, 1, 3)
    k = k.reshape(B, T, num_heads, head_dim).transpose(0, 2, 1, 3)
    v = v.reshape(B, T, num_heads, head_dim).transpose(0, 2, 1, 3)
    scores = jnp.einsum("bhqd,bhkd->bhqk", q, k) / jnp.sqrt(jnp.float32(head_dim))
    mask = jnp.triu(jnp.ones((T, T), dtype=bool), k=1)
    scores = jnp.where(mask, -jnp.inf, scores)
    w = jax.nn.softmax(scores, axis=-1)
    ctx = jnp.einsum("bhqk,bhkd->bhqd", w, v).transpose(0, 2, 1, 3).reshape(B, T, E)
    attn = ctx @ params["wo"] + params["bo"][0]
    x1 = x + attn
    h2 = ln(x1, params["g2"][0], params["s2"][0])
    ff = h2 @ params["w1"] + params["b1"][0]
    c = jnp.sqrt(2.0 / jnp.pi)
    ff = 0.5 * ff * (1.0 + jnp.tanh(c * (ff + 0.044715 * ff ** 3)))
    ff = ff @ params["w2"] + params["b2"][0]
    return x1 + ff


def init_params(key, emb_dim):
    E, H = emb_dim, 4 * emb_dim
    ks = jax.random.split(key, 8)
    s = 0.02
    return {
        "wq": s * jax.random.normal(ks[0], (E, E), jnp.float32),
        "wk": s * jax.random.normal(ks[1], (E, E), jnp.float32),
        "wv": s * jax.random.normal(ks[2], (E, E), jnp.float32),
        "wo": s * jax.random.normal(ks[3], (E, E), jnp.float32),
        "bo": s * jax.random.normal(ks[4], (1, E), jnp.float32),
        "g1": jnp.ones((1, E), jnp.float32),
        "s1": jnp.zeros((1, E), jnp.float32),
        "g2": jnp.ones((1, E), jnp.float32),
        "s2": jnp.zeros((1, E), jnp.float32),
        "w1": s * jax.random.normal(ks[5], (E, H), jnp.float32),
        "b1": s * jax.random.normal(ks[6], (1, H), jnp.float32),
        "w2": s * jax.random.normal(ks[7], (H, E), jnp.float32),
        "b2": jnp.zeros((1, E), jnp.float32),
    }


if __name__ == "__main__":
    # Small config consistent with the module: cfg = {emb_dim: 32, n_heads: 4,
    # context_length: 8, drop_rate: 0.0, qkv_bias: False}
    B, T, E, NH = 2, 8, 32, 4

    key = jax.random.PRNGKey(0)
    kx, kp = jax.random.split(key)
    x = jax.random.normal(kx, (B, T, E), jnp.float32)
    params = init_params(kp, E)

    ref = transformer_block_ref(x, params, num_heads=NH)

    # f32 MXU-operand path: matches the f32 reference tightly.
    out_f32 = jax.block_until_ready(
        transformer_block(x, params, num_heads=NH, use_bf16_matmul=False))
    assert out_f32.shape == (B, T, E)
    assert jnp.all(jnp.isfinite(out_f32))
    assert jnp.allclose(out_f32, ref, rtol=2e-3, atol=2e-3), (
        float(jnp.max(jnp.abs(out_f32 - ref))))

    # bf16 MXU-operand / f32-accumulate fast path: relaxed tolerance.
    out_bf16 = jax.block_until_ready(
        transformer_block(x, params, num_heads=NH, use_bf16_matmul=True))
    assert jnp.all(jnp.isfinite(out_bf16))
    assert jnp.allclose(out_bf16, ref, rtol=5e-2, atol=5e-2), (
        float(jnp.max(jnp.abs(out_bf16 - ref))))

    print("KERNEL_OK")
</pallas_src>

<mosaic_0001>
module attributes {stable_mosaic.version = 11 : i64} {
  func.func @transformer_block_kernel(%arg0: i32, %arg1: memref<1x8x32xf32, #tpu.memory_space<vmem>>, %arg2: memref<32x96xf32, #tpu.memory_space<vmem>>, %arg3: memref<32x32xf32, #tpu.memory_space<vmem>>, %arg4: memref<1x32xf32, #tpu.memory_space<vmem>>, %arg5: memref<1x32xf32, #tpu.memory_space<vmem>>, %arg6: memref<1x32xf32, #tpu.memory_space<vmem>>, %arg7: memref<1x32xf32, #tpu.memory_space<vmem>>, %arg8: memref<1x32xf32, #tpu.memory_space<vmem>>, %arg9: memref<32x128xf32, #tpu.memory_space<vmem>>, %arg10: memref<1x128xf32, #tpu.memory_space<vmem>>, %arg11: memref<128x32xf32, #tpu.memory_space<vmem>>, %arg12: memref<1x32xf32, #tpu.memory_space<vmem>>, %arg13: memref<1x8x32xf32, #tpu.memory_space<vmem>>, %arg14: memref<8x32xf32, #tpu.memory_space<vmem>>) attributes {dimension_semantics = [#tpu.dimension_semantics<parallel>], iteration_bounds = array<i64: 2>, scalar_prefetch = 0 : i64, scratch_operands = 1 : i64, tpu.core_type = #tpu.core_type<tc>, window_params = [{transform_indices = @transform_0, window_bounds = array<i64: 1, 8, 32>}, {pipeline_mode = #tpu.pipeline_mode<synchronous>, transform_indices = @transform_1, window_bounds = array<i64: 32, 96>}, {pipeline_mode = #tpu.pipeline_mode<synchronous>, transform_indices = @transform_2, window_bounds = array<i64: 32, 32>}, {pipeline_mode = #tpu.pipeline_mode<synchronous>, transform_indices = @transform_3, window_bounds = array<i64: 1, 32>}, {pipeline_mode = #tpu.pipeline_mode<synchronous>, transform_indices = @transform_4, window_bounds = array<i64: 1, 32>}, {pipeline_mode = #tpu.pipeline_mode<synchronous>, transform_indices = @transform_5, window_bounds = array<i64: 1, 32>}, {pipeline_mode = #tpu.pipeline_mode<synchronous>, transform_indices = @transform_6, window_bounds = array<i64: 1, 32>}, {pipeline_mode = #tpu.pipeline_mode<synchronous>, transform_indices = @transform_7, window_bounds = array<i64: 1, 32>}, {pipeline_mode = #tpu.pipeline_mode<synchronous>, transform_indices = @transform_8, window_bounds = array<i64: 32, 128>}, {pipeline_mode = #tpu.pipeline_mode<synchronous>, transform_indices = @transform_9, window_bounds = array<i64: 1, 128>}, {pipeline_mode = #tpu.pipeline_mode<synchronous>, transform_indices = @transform_10, window_bounds = array<i64: 128, 32>}, {pipeline_mode = #tpu.pipeline_mode<synchronous>, transform_indices = @transform_11, window_bounds = array<i64: 1, 32>}, {transform_indices = @transform_12, window_bounds = array<i64: 1, 8, 32>}]} {
    %c0 = arith.constant 0 : index
    %c0_0 = arith.constant 0 : index
    %c0_1 = arith.constant 0 : index
    %0 = vector.load %arg1[%c0, %c0_0, %c0_1] : memref<1x8x32xf32, #tpu.memory_space<vmem>>, vector<1x8x32xf32>
    %1 = vector.shape_cast %0 : vector<1x8x32xf32> to vector<8x32xf32>
    %c0_2 = arith.constant 0 : index
    %c0_3 = arith.constant 0 : index
    %2 = vector.load %arg5[%c0_2, %c0_3] : memref<1x32xf32, #tpu.memory_space<vmem>>, vector<1x32xf32>
    %3 = vector.shape_cast %2 : vector<1x32xf32> to vector<32xf32>
    %c0_4 = arith.constant 0 : index
    %c0_5 = arith.constant 0 : index
    %4 = vector.load %arg6[%c0_4, %c0_5] : memref<1x32xf32, #tpu.memory_space<vmem>>, vector<1x32xf32>
    %5 = vector.shape_cast %4 : vector<1x32xf32> to vector<32xf32>
    %cst = arith.constant dense<0.000000e+00> : vector<8xf32>
    %6 = vector.multi_reduction <add>, %1, %cst [1] : vector<8x32xf32> to vector<8xf32>
    %7 = vector.shape_cast %6 : vector<8xf32> to vector<8x1xf32>
    %cst_6 = arith.constant 3.200000e+01 : f32
    %8 = vector.broadcast %cst_6 : f32 to vector<8x1xf32>
    %9 = arith.divf %7, %8 : vector<8x1xf32>
    %10 = vector.broadcast %9 : vector<8x1xf32> to vector<8x32xf32>
    %11 = arith.subf %1, %10 : vector<8x32xf32>
    %12 = arith.mulf %11, %11 : vector<8x32xf32>
    %cst_7 = arith.constant dense<0.000000e+00> : vector<8xf32>
    %13 = vector.multi_reduction <add>, %12, %cst_7 [1] : vector<8x32xf32> to vector<8xf32>
    %14 = vector.shape_cast %13 : vector<8xf32> to vector<8x1xf32>
    %cst_8 = arith.constant 3.200000e+01 : f32
    %15 = vector.broadcast %cst_8 : f32 to vector<8x1xf32>
    %16 = arith.divf %14, %15 : vector<8x1xf32>
    %17 = vector.broadcast %9 : vector<8x1xf32> to vector<8x32xf32>
    %18 = arith.subf %1, %17 : vector<8x32xf32>
    %cst_9 = arith.constant 9.99999974E-6 : f32
    %19 = vector.broadcast %cst_9 : f32 to vector<8x1xf32>
    %20 = arith.addf %16, %19 : vector<8x1xf32>
    %21 = math.rsqrt %20 : vector<8x1xf32>
    %22 = vector.broadcast %21 : vector<8x1xf32> to vector<8x32xf32>
    %23 = arith.mulf %18, %22 : vector<8x32xf32>
    %24 = vector.shape_cast %3 : vector<32xf32> to vector<1x32xf32>
    %25 = vector.broadcast %24 : vector<1x32xf32> to vector<8x32xf32>
    %26 = arith.mulf %23, %25 : vector<8x32xf32>
    %27 = vector.shape_cast %5 : vector<32xf32> to vector<1x32xf32>
    %28 = vector.broadcast %27 : vector<1x32xf32> to vector<8x32xf32>
    %29 = arith.addf %26, %28 : vector<8x32xf32>
    %c0_10 = arith.constant 0 : index
    %c0_11 = arith.constant 0 : index
    %30 = vector.load %arg2[%c0_10, %c0_11] : memref<32x96xf32, #tpu.memory_space<vmem>>, vector<32x96xf32>
    %cst_12 = arith.constant dense<0.000000e+00> : vector<8x96xf32>
    %31 = tpu.matmul %29, %30, %cst_12 {dimension_numbers = #tpu.dot_dimension_numbers<[1], [0], [0], [1], [0, 0, 1, 1], [], []>} : vector<8x32xf32>, vector<32x96xf32>, vector<8x96xf32> -> vector<8x96xf32>
    %32 = vector.extract_strided_slice %31 {offsets = [0, 0], sizes = [8, 32], strides = [1, 1]} : vector<8x96xf32> to vector<8x32xf32>
    %cst_13 = arith.constant 0.353553385 : f32
    %33 = vector.broadcast %cst_13 : f32 to vector<8x32xf32>
    %34 = arith.mulf %32, %33 : vector<8x32xf32>
    %35 = vector.shape_cast %34 : vector<8x32xf32> to vector<8x4x8xf32>
    %36 = tpu.transpose %35, [1, 0, 2] : vector<8x4x8xf32> -> vector<4x8x8xf32>
    %37 = vector.extract_strided_slice %31 {offsets = [0, 32], sizes = [8, 32], strides = [1, 1]} : vector<8x96xf32> to vector<8x32xf32>
    %38 = vector.shape_cast %37 : vector<8x32xf32> to vector<8x4x8xf32>
    %39 = tpu.transpose %38, [1, 0, 2] : vector<8x4x8xf32> -> vector<4x8x8xf32>
    %40 = vector.extract_strided_slice %31 {offsets = [0, 64], sizes = [8, 32], strides = [1, 1]} : vector<8x96xf32> to vector<8x32xf32>
    %41 = vector.shape_cast %40 : vector<8x32xf32> to vector<8x4x8xf32>
    %42 = tpu.transpose %41, [1, 0, 2] : vector<8x4x8xf32> -> vector<4x8x8xf32>
    "tpu.trace_start"() <{level = 10 : i32, message = "hqd,hkd->hqk"}> : () -> ()
    %cst_14 = arith.constant dense<0.000000e+00> : vector<4x8x8xf32>
    %43 = tpu.matmul %36, %39, %cst_14 {dimension_numbers = #tpu.dot_dimension_numbers<[2], [2], [1], [1], [0, 0, 0, 1, 1, 1], [0], [0]>} : vector<4x8x8xf32>, vector<4x8x8xf32>, vector<4x8x8xf32> -> vector<4x8x8xf32>
    "tpu.trace_stop"() : () -> ()
    %44 = tpu.iota {dimensions = array<i32: 0>} : vector<8x8xi32>
    %c0_i32 = arith.constant 0 : i32
    %45 = vector.broadcast %c0_i32 : i32 to vector<8x8xi32>
    %46 = arith.addi %44, %45 : vector<8x8xi32>
    %47 = tpu.iota {dimensions = array<i32: 1>} : vector<8x8xi32>
    %48 = arith.cmpi sgt, %47, %46 : vector<8x8xi32>
    %49 = vector.shape_cast %48 : vector<8x8xi1> to vector<1x8x8xi1>
    %cst_15 = arith.constant -1.000000e+30 : f32
    %50 = vector.shape_cast %49 : vector<1x8x8xi1> to vector<1x8x8xi1>
    %51 = vector.broadcast %50 : vector<1x8x8xi1> to vector<4x8x8xi1>
    %52 = vector.broadcast %cst_15 : f32 to vector<4x8x8xf32>
    %53 = arith.select %51, %52, %43 : vector<4x8x8xi1>, vector<4x8x8xf32>
    %cst_16 = arith.constant dense<0xFF800000> : vector<4x8xf32>
    %54 = vector.multi_reduction <maximumf>, %53, %cst_16 [2] : vector<4x8x8xf32> to vector<4x8xf32>
    %55 = vector.shape_cast %54 : vector<4x8xf32> to vector<4x8x1xf32>
    %56 = vector.broadcast %55 : vector<4x8x1xf32> to vector<4x8x8xf32>
    %57 = arith.subf %53, %56 : vector<4x8x8xf32>
    %58 = math.exp %57 : vector<4x8x8xf32>
    %cst_17 = arith.constant dense<0.000000e+00> : vector<4x8xf32>
    %59 = vector.multi_reduction <add>, %58, %cst_17 [2] : vector<4x8x8xf32> to vector<4x8xf32>
    %60 = vector.shape_cast %59 : vector<4x8xf32> to vector<4x8x1xf32>
    %61 = tpu.reciprocal %60 {approx = true} : vector<4x8x1xf32> -> vector<4x8x1xf32>
    %62 = vector.broadcast %61 : vector<4x8x1xf32> to vector<4x8x8xf32>
    %63 = arith.mulf %58, %62 : vector<4x8x8xf32>
    "tpu.trace_start"() <{level = 10 : i32, message = "hqk,hkd->hqd"}> : () -> ()
    %cst_18 = arith.constant dense<0.000000e+00> : vector<4x8x8xf32>
    %64 = tpu.matmul %63, %42, %cst_18 {dimension_numbers = #tpu.dot_dimension_numbers<[2], [1], [1], [2], [0, 0, 0, 1, 1, 2], [0], [0]>} : vector<4x8x8xf32>, vector<4x8x8xf32>, vector<4x8x8xf32> -> vector<4x8x8xf32>
    "tpu.trace_stop"() : () -> ()
    %65 = tpu.transpose %64, [1, 0, 2] : vector<4x8x8xf32> -> vector<8x4x8xf32>
    %66 = vector.shape_cast %65 : vector<8x4x8xf32> to vector<8x32xf32>
    %c0_19 = arith.constant 0 : index
    %c0_20 = arith.constant 0 : index
    %67 = vector.load %arg14[%c0_19, %c0_20] : memref<8x32xf32, #tpu.memory_space<vmem>>, vector<8x32xf32>
    tpu.vector_store %arg14[%c0_19, %c0_20], %66 {strides = array<i32>} : memref<8x32xf32, #tpu.memory_space<vmem>>, vector<8x32xf32>,
    %c0_21 = arith.constant 0 : index
    %c0_22 = arith.constant 0 : index
    %68 = vector.load %arg14[%c0_21, %c0_22] : memref<8x32xf32, #tpu.memory_space<vmem>>, vector<8x32xf32>
    %c0_23 = arith.constant 0 : index
    %c0_24 = arith.constant 0 : index
    %69 = vector.load %arg3[%c0_23, %c0_24] : memref<32x32xf32, #tpu.memory_space<vmem>>, vector<32x32xf32>
    %cst_25 = arith.constant dense<0.000000e+00> : vector<8x32xf32>
    %70 = tpu.matmul %68, %69, %cst_25 {dimension_numbers = #tpu.dot_dimension_numbers<[1], [0], [0], [1], [0, 0, 1, 1], [], []>} : vector<8x32xf32>, vector<32x32xf32>, vector<8x32xf32> -> vector<8x32xf32>
    %c0_26 = arith.constant 0 : index
    %c0_27 = arith.constant 0 : index
    %71 = vector.load %arg4[%c0_26, %c0_27] : memref<1x32xf32, #tpu.memory_space<vmem>>, vector<1x32xf32>
    %72 = vector.shape_cast %71 : vector<1x32xf32> to vector<32xf32>
    %73 = vector.shape_cast %72 : vector<32xf32> to vector<1x32xf32>
    %74 = vector.broadcast %73 : vector<1x32xf32> to vector<8x32xf32>
    %75 = arith.addf %70, %74 : vector<8x32xf32>
    %76 = arith.addf %1, %75 : vector<8x32xf32>
    %c0_28 = arith.constant 0 : index
    %c0_29 = arith.constant 0 : index
    %77 = vector.load %arg7[%c0_28, %c0_29] : memref<1x32xf32, #tpu.memory_space<vmem>>, vector<1x32xf32>
    %78 = vector.shape_cast %77 : vector<1x32xf32> to vector<32xf32>
    %c0_30 = arith.constant 0 : index
    %c0_31 = arith.constant 0 : index
    %79 = vector.load %arg8[%c0_30, %c0_31] : memref<1x32xf32, #tpu.memory_space<vmem>>, vector<1x32xf32>
    %80 = vector.shape_cast %79 : vector<1x32xf32> to vector<32xf32>
    %cst_32 = arith.constant dense<0.000000e+00> : vector<8xf32>
    %81 = vector.multi_reduction <add>, %76, %cst_32 [1] : vector<8x32xf32> to vector<8xf32>
    %82 = vector.shape_cast %81 : vector<8xf32> to vector<8x1xf32>
    %cst_33 = arith.constant 3.200000e+01 : f32
    %83 = vector.broadcast %cst_33 : f32 to vector<8x1xf32>
    %84 = arith.divf %82, %83 : vector<8x1xf32>
    %85 = vector.broadcast %84 : vector<8x1xf32> to vector<8x32xf32>
    %86 = arith.subf %76, %85 : vector<8x32xf32>
    %87 = arith.mulf %86, %86 : vector<8x32xf32>
    %cst_34 = arith.constant dense<0.000000e+00> : vector<8xf32>
    %88 = vector.multi_reduction <add>, %87, %cst_34 [1] : vector<8x32xf32> to vector<8xf32>
    %89 = vector.shape_cast %88 : vector<8xf32> to vector<8x1xf32>
    %cst_35 = arith.constant 3.200000e+01 : f32
    %90 = vector.broadcast %cst_35 : f32 to vector<8x1xf32>
    %91 = arith.divf %89, %90 : vector<8x1xf32>
    %92 = vector.broadcast %84 : vector<8x1xf32> to vector<8x32xf32>
    %93 = arith.subf %76, %92 : vector<8x32xf32>
    %cst_36 = arith.constant 9.99999974E-6 : f32
    %94 = vector.broadcast %cst_36 : f32 to vector<8x1xf32>
    %95 = arith.addf %91, %94 : vector<8x1xf32>
    %96 = math.rsqrt %95 : vector<8x1xf32>
    %97 = vector.broadcast %96 : vector<8x1xf32> to vector<8x32xf32>
    %98 = arith.mulf %93, %97 : vector<8x32xf32>
    %99 = vector.shape_cast %78 : vector<32xf32> to vector<1x32xf32>
    %100 = vector.broadcast %99 : vector<1x32xf32> to vector<8x32xf32>
    %101 = arith.mulf %98, %100 : vector<8x32xf32>
    %102 = vector.shape_cast %80 : vector<32xf32> to vector<1x32xf32>
    %103 = vector.broadcast %102 : vector<1x32xf32> to vector<8x32xf32>
    %104 = arith.addf %101, %103 : vector<8x32xf32>
    %c0_37 = arith.constant 0 : index
    %c0_38 = arith.constant 0 : index
    %105 = vector.load %arg9[%c0_37, %c0_38] : memref<32x128xf32, #tpu.memory_space<vmem>>, vector<32x128xf32>
    %cst_39 = arith.constant dense<0.000000e+00> : vector<8x128xf32>
    %106 = tpu.matmul %104, %105, %cst_39 {dimension_numbers = #tpu.dot_dimension_numbers<[1], [0], [0], [1], [0, 0, 1, 1], [], []>} : vector<8x32xf32>, vector<32x128xf32>, vector<8x128xf32> -> vector<8x128xf32>
    %c0_40 = arith.constant 0 : index
    %c0_41 = arith.constant 0 : index
    %107 = vector.load %arg10[%c0_40, %c0_41] : memref<1x128xf32, #tpu.memory_space<vmem>>, vector<1x128xf32>
    %108 = vector.shape_cast %107 : vector<1x128xf32> to vector<128xf32>
    %109 = vector.shape_cast %108 : vector<128xf32> to vector<1x128xf32>
    %110 = vector.broadcast %109 : vector<1x128xf32> to vector<8x128xf32>
    %111 = arith.addf %106, %110 : vector<8x128xf32>
    %cst_42 = arith.constant 0.636619746 : f32
    %112 = math.sqrt %cst_42 : f32
    %cst_43 = arith.constant 5.000000e-01 : f32
    %113 = vector.broadcast %cst_43 : f32 to vector<8x128xf32>
    %114 = arith.mulf %113, %111 : vector<8x128xf32>
    %cst_44 = arith.constant 4.471500e-02 : f32
    %115 = vector.broadcast %cst_44 : f32 to vector<8x128xf32>
    %116 = arith.mulf %115, %111 : vector<8x128xf32>
    %117 = arith.mulf %116, %111 : vector<8x128xf32>
    %118 = arith.mulf %117, %111 : vector<8x128xf32>
    %119 = arith.addf %111, %118 : vector<8x128xf32>
    %120 = vector.broadcast %112 : f32 to vector<8x128xf32>
    %121 = arith.mulf %120, %119 : vector<8x128xf32>
    %122 = math.tanh %121 : vector<8x128xf32>
    %cst_45 = arith.constant 1.000000e+00 : f32
    %123 = vector.broadcast %cst_45 : f32 to vector<8x128xf32>
    %124 = arith.addf %123, %122 : vector<8x128xf32>
    %125 = arith.mulf %114, %124 : vector<8x128xf32>
    %c0_46 = arith.constant 0 : index
    %c0_47 = arith.constant 0 : index
    %126 = vector.load %arg11[%c0_46, %c0_47] : memref<128x32xf32, #tpu.memory_space<vmem>>, vector<128x32xf32>
    %cst_48 = arith.constant dense<0.000000e+00> : vector<8x32xf32>
    %127 = tpu.matmul %125, %126, %cst_48 {dimension_numbers = #tpu.dot_dimension_numbers<[1], [0], [0], [1], [0, 0, 1, 1], [], []>} : vector<8x128xf32>, vector<128x32xf32>, vector<8x32xf32> -> vector<8x32xf32>
    %128 = arith.addf %76, %127 : vector<8x32xf32>
    %c0_49 = arith.constant 0 : index
    %c0_50 = arith.constant 0 : index
    %129 = vector.load %arg12[%c0_49, %c0_50] : memref<1x32xf32, #tpu.memory_space<vmem>>, vector<1x32xf32>
    %130 = vector.shape_cast %129 : vector<1x32xf32> to vector<32xf32>
    %131 = vector.shape_cast %130 : vector<32xf32> to vector<1x32xf32>
    %132 = vector.broadcast %131 : vector<1x32xf32> to vector<8x32xf32>
    %133 = arith.addf %128, %132 : vector<8x32xf32>
    %c0_51 = arith.constant 0 : index
    %c0_52 = arith.constant 0 : index
    %c0_53 = arith.constant 0 : index
    %134 = vector.load %arg13[%c0_51, %c0_52, %c0_53] : memref<1x8x32xf32, #tpu.memory_space<vmem>>, vector<1x8x32xf32>
    %135 = vector.shape_cast %134 : vector<1x8x32xf32> to vector<8x32xf32>
    %136 = vector.shape_cast %133 : vector<8x32xf32> to vector<1x8x32xf32>
    tpu.vector_store %arg13[%c0_51, %c0_52, %c0_53], %136 {strides = array<i32>} : memref<1x8x32xf32, #tpu.memory_space<vmem>>, vector<1x8x32xf32>,
    return
  }
  func.func @transform_0(%arg0: i32) -> (i32, i32, i32) {
    %c0_i32 = arith.constant 0 : i32
    %c0_i32_0 = arith.constant 0 : i32
    %c0_i32_1 = arith.constant 0 : i32
    return %arg0, %c0_i32, %c0_i32_0 : i32, i32, i32
  }
  func.func @transform_1(%arg0: i32) -> (i32, i32) {
    %c0_i32 = arith.constant 0 : i32
    %c0_i32_0 = arith.constant 0 : i32
    %c0_i32_1 = arith.constant 0 : i32
    return %c0_i32, %c0_i32_0 : i32, i32
  }
  func.func @transform_2(%arg0: i32) -> (i32, i32) {
    %c0_i32 = arith.constant 0 : i32
    %c0_i32_0 = arith.constant 0 : i32
    %c0_i32_1 = arith.constant 0 : i32
    return %c0_i32, %c0_i32_0 : i32, i32
  }
  func.func @transform_3(%arg0: i32) -> (i32, i32) {
    %c0_i32 = arith.constant 0 : i32
    %c0_i32_0 = arith.constant 0 : i32
    %c0_i32_1 = arith.constant 0 : i32
    return %c0_i32, %c0_i32_0 : i32, i32
  }
  func.func @transform_4(%arg0: i32) -> (i32, i32) {
    %c0_i32 = arith.constant 0 : i32
    %c0_i32_0 = arith.constant 0 : i32
    %c0_i32_1 = arith.constant 0 : i32
    return %c0_i32, %c0_i32_0 : i32, i32
  }
  func.func @transform_5(%arg0: i32) -> (i32, i32) {
    %c0_i32 = arith.constant 0 : i32
    %c0_i32_0 = arith.constant 0 : i32
    %c0_i32_1 = arith.constant 0 : i32
    return %c0_i32, %c0_i32_0 : i32, i32
  }
  func.func @transform_6(%arg0: i32) -> (i32, i32) {
    %c0_i32 = arith.constant 0 : i32
    %c0_i32_0 = arith.constant 0 : i32
    %c0_i32_1 = arith.constant 0 : i32
    return %c0_i32, %c0_i32_0 : i32, i32
  }
  func.func @transform_7(%arg0: i32) -> (i32, i32) {
    %c0_i32 = arith.constant 0 : i32
    %c0_i32_0 = arith.constant 0 : i32
    %c0_i32_1 = arith.constant 0 : i32
    return %c0_i32, %c0_i32_0 : i32, i32
  }
  func.func @transform_8(%arg0: i32) -> (i32, i32) {
    %c0_i32 = arith.constant 0 : i32
    %c0_i32_0 = arith.constant 0 : i32
    %c0_i32_1 = arith.constant 0 : i32
    return %c0_i32, %c0_i32_0 : i32, i32
  }
  func.func @transform_9(%arg0: i32) -> (i32, i32) {
    %c0_i32 = arith.constant 0 : i32
    %c0_i32_0 = arith.constant 0 : i32
    %c0_i32_1 = arith.constant 0 : i32
    return %c0_i32, %c0_i32_0 : i32, i32
  }
  func.func @transform_10(%arg0: i32) -> (i32, i32) {
    %c0_i32 = arith.constant 0 : i32
    %c0_i32_0 = arith.constant 0 : i32
    %c0_i32_1 = arith.constant 0 : i32
    return %c0_i32, %c0_i32_0 : i32, i32
  }
  func.func @transform_11(%arg0: i32) -> (i32, i32) {
    %c0_i32 = arith.constant 0 : i32
    %c0_i32_0 = arith.constant 0 : i32
    %c0_i32_1 = arith.constant 0 : i32
    return %c0_i32, %c0_i32_0 : i32, i32
  }
  func.func @transform_12(%arg0: i32) -> (i32, i32, i32) {
    %c0_i32 = arith.constant 0 : i32
    %c0_i32_0 = arith.constant 0 : i32
    %c0_i32_1 = arith.constant 0 : i32
    return %arg0, %c0_i32, %c0_i32_0 : i32, i32, i32
  }
}

</mosaic_0001>

<llo_original>
// kernel: tpu_custom_call.1
$region0: #{tpu_custom_call.1}
  #allocation0 [shape = 'u32[]', space=smem, size = 0x4, offset = 0x4, fixed_abs, tag = 'smem constant byte address 0x4 - core index']
  #allocation1 [shape = 'u32[144,128]{1,0:T(1,128)}', space=vmem, size = 0x12000, scoped, tag = 'internal scratch']
  #allocation2 [shape = 'f32[8,32]{1,0:T(8,128)}', space=vmem, size = 0x1000, scoped, tag = 'scratch operand']
  %s0 = inlined_call_operand.vmem [shape: f32[2,8,32], index: 0, kind: input, shape index: {}]
  %s1 = inlined_call_operand.vmem [shape: f32[32,96], index: 1, kind: input, shape index: {}]
  %s2 = inlined_call_operand.vmem [shape: f32[32,32], index: 2, kind: input, shape index: {}]
  %s3 = inlined_call_operand.vmem [shape: f32[1,32], index: 3, kind: input, shape index: {}]
  %s4 = inlined_call_operand.vmem [shape: f32[1,32], index: 4, kind: input, shape index: {}]
  %s5 = inlined_call_operand.vmem [shape: f32[1,32], index: 5, kind: input, shape index: {}]
  %s6 = inlined_call_operand.vmem [shape: f32[1,32], index: 6, kind: input, shape index: {}]
  %s7 = inlined_call_operand.vmem [shape: f32[1,32], index: 7, kind: input, shape index: {}]
  %s8 = inlined_call_operand.vmem [shape: f32[32,128], index: 8, kind: input, shape index: {}]
  %s9 = inlined_call_operand.vmem [shape: f32[1,128], index: 9, kind: input, shape index: {}]
  %s10 = inlined_call_operand.vmem [shape: f32[128,32], index: 10, kind: input, shape index: {}]
  %s11 = inlined_call_operand.vmem [shape: f32[1,32], index: 11, kind: input, shape index: {}]
  %s12 = inlined_call_operand.hbm [shape: f32[2,8,32], index: 12, kind: output, shape index: {}]
  %s13 = sld [smem:[#allocation0]]
  $region81: #{tpu_custom_call.1} parent=0
    _
  %s15 = ssub.s32 1, %s13
  %s16 = scalar_select 0, %s15, %s13
  $region1: #{tpu_custom_call.1} parent=0
    #allocation3 [shape = 'u8[8192]{0}', space=vmem, size = 0x2000, scoped, tag = 'output window, operand 0']
    #allocation4 [shape = 's32[2]{0}', space=sflag, size = 0x8, scoped, tag = 'scoped memory for tpu_custom_call.1']
    %17 = vsyncpa [#allocation4], 0
    %s18 = scalar_lea.sflag [#allocation4], 1
    %19 = vsyncpa %s18, 0
    loop: start=0, step=1, limit=4
    $region2: #{tpu_custom_call.1} parent=1 // loop_pre_header
      _
    $region3: #{tpu_custom_call.1} parent=1 // loop_header
      %s21 = sphi 0, %s25
      %p22 = scmp.ge.s32.totalorder %s21, 4
      %s31 = sphi 0, %s33
      %s34 = sphi 0, %s31
      %s35 = sphi 0, %s34
      %s51 = sphi 0, %s35
      %s55 = sphi 0, %s55
      %s57 = sphi 0, %s55
      %s58 = sphi 0, %s57
      %s72 = sphi 0, %s58
      %s76 = sphi 0, %s76
      %s78 = sphi 0, %s76
      %s79 = sphi 0, %s78
      %s93 = sphi 0, %s79
      %s97 = sphi 0, %s97
      %s99 = sphi 0, %s97
      %s100 = sphi 0, %s99
      %s114 = sphi 0, %s100
      %s118 = sphi 0, %s118
      %s120 = sphi 0, %s118
      %s121 = sphi 0, %s120
      %s135 = sphi 0, %s121
      %s139 = sphi 0, %s139
      %s141 = sphi 0, %s139
      %s142 = sphi 0, %s141
      %s156 = sphi 0, %s142
      %s160 = sphi 0, %s160
      %s162 = sphi 0, %s160
      %s163 = sphi 0, %s162
      %s177 = sphi 0, %s163
      %s181 = sphi 0, %s181
      %s183 = sphi 0, %s181
      %s184 = sphi 0, %s183
      %s198 = sphi 0, %s184
      %s202 = sphi 0, %s202
      %s204 = sphi 0, %s202
      %s205 = sphi 0, %s204
      %s219 = sphi 0, %s205
      %s223 = sphi 0, %s223
      %s225 = sphi 0, %s223
      %s226 = sphi 0, %s225
      %s240 = sphi 0, %s226
      %s244 = sphi 0, %s244
      %s246 = sphi 0, %s244
      %s247 = sphi 0, %s246
      %s261 = sphi 0, %s247
      %s265 = sphi 0, %s265
      %s267 = sphi 0, %s265
      %s268 = sphi 0, %s267
      %s282 = sphi 0, %s268
      %s288 = sphi 0, %s290
      %s291 = sphi 0, %s288
      %s292 = sphi 0, %s291
      %s308 = sphi 0, %s292
    $region4: #{tpu_custom_call.1} parent=1 // loop_header_branch
      %24 = sbr.rel (%p22) target = $region8
    $region5: #{tpu_custom_call.1} parent=1 // loop_body
      %s26 = ssub.s32 %s21, 1
      %s27 = ssub.s32 %s21, 2
      %s28 = sadd.s32 %s21, 1
      %s29 = ssub.s32 %s21, %s28
      %p30 = scmp.eq.s32.totalorder %s29, 0
      %s32 = sadd.s32 %s31, 1
      %s33 = scalar_select %p30, %s31, %s32
      %p36 = pneg %p30
      %p37 = scmp.eq.s32.totalorder %s21, 1
      %p38 = por %p36, %p37
      %p39 = scmp.ne.s32.totalorder %s31, %s34
      %p40 = scmp.eq.s32.totalorder %s21, 0
      %p41 = por %p39, %p40
      %p42 = scmp.ne.s32.totalorder %s31, %s34
      %p43 = scmp.eq.s32.totalorder %s26, 1
      %p44 = por %p42, %p43
      %p45 = scmp.ne.s32.totalorder %s34, %s35
      %p46 = scmp.eq.s32.totalorder %s26, 0
      %p47 = por %p45, %p46
      %p48 = scmp.ne.s32.totalorder %s34, %s35
      %p49 = scmp.eq.s32.totalorder %s27, 1
      %p50 = por %p48, %p49
      %p52 = scmp.ne.s32.totalorder %s35, %s51
      %p53 = scmp.eq.s32.totalorder %s27, 0
      %p54 = por %p52, %p53
      %s56 = sadd.s32 %s55, 1
      %p59 = scmp.eq.s32.totalorder %s21, 1
      %p60 = scmp.ne.s32.totalorder %s55, %s57
      %p61 = scmp.eq.s32.totalorder %s21, 0
      %p62 = por %p60, %p61
      %p63 = scmp.ne.s32.totalorder %s55, %s57
      %p64 = scmp.eq.s32.totalorder %s26, 1
      %p65 = por %p63, %p64
      %p66 = scmp.ne.s32.totalorder %s57, %s58
      %p67 = scmp.eq.s32.totalorder %s26, 0
      %p68 = por %p66, %p67
      %p69 = scmp.ne.s32.totalorder %s57, %s58
      %p70 = scmp.eq.s32.totalorder %s27, 1
      %p71 = por %p69, %p70
      %p73 = scmp.ne.s32.totalorder %s58, %s72
      %p74 = scmp.eq.s32.totalorder %s27, 0
      %p75 = por %p73, %p74
      %s77 = sadd.s32 %s76, 1
      %p80 = scmp.eq.s32.totalorder %s21, 1
      %p81 = scmp.ne.s32.totalorder %s76, %s78
      %p82 = scmp.eq.s32.totalorder %s21, 0
      %p83 = por %p81, %p82
      %p84 = scmp.ne.s32.totalorder %s76, %s78
      %p85 = scmp.eq.s32.totalorder %s26, 1
      %p86 = por %p84, %p85
      %p87 = scmp.ne.s32.totalorder %s78, %s79
      %p88 = scmp.eq.s32.totalorder %s26, 0
      %p89 = por %p87, %p88
      %p90 = scmp.ne.s32.totalorder %s78, %s79
      %p91 = scmp.eq.s32.totalorder %s27, 1
      %p92 = por %p90, %p91
      %p94 = scmp.ne.s32.totalorder %s79, %s93
      %p95 = scmp.eq.s32.totalorder %s27, 0
      %p96 = por %p94, %p95
      %s98 = sadd.s32 %s97, 1
      %p101 = scmp.eq.s32.totalorder %s21, 1
      %p102 = scmp.ne.s32.totalorder %s97, %s99
      %p103 = scmp.eq.s32.totalorder %s21, 0
      %p104 = por %p102, %p103
      %p105 = scmp.ne.s32.totalorder %s97, %s99
      %p106 = scmp.eq.s32.totalorder %s26, 1
      %p107 = por %p105, %p106
      %p108 = scmp.ne.s32.totalorder %s99, %s100
      %p109 = scmp.eq.s32.totalorder %s26, 0
      %p110 = por %p108, %p109
      %p111 = scmp.ne.s32.totalorder %s99, %s100
      %p112 = scmp.eq.s32.totalorder %s27, 1
      %p113 = por %p111, %p112
      %p115 = scmp.ne.s32.totalorder %s100, %s114
      %p116 = scmp.eq.s32.totalorder %s27, 0
      %p117 = por %p115, %p116
      %s119 = sadd.s32 %s118, 1
      %p122 = scmp.eq.s32.totalorder %s21, 1
      %p123 = scmp.ne.s32.totalorder %s118, %s120
      %p124 = scmp.eq.s32.totalorder %s21, 0
      %p125 = por %p123, %p124
      %p126 = scmp.ne.s32.totalorder %s118, %s120
      %p127 = scmp.eq.s32.totalorder %s26, 1
      %p128 = por %p126, %p127
      %p129 = scmp.ne.s32.totalorder %s120, %s121
      %p130 = scmp.eq.s32.totalorder %s26, 0
      %p131 = por %p129, %p130
      %p132 = scmp.ne.s32.totalorder %s120, %s121
      %p133 = scmp.eq.s32.totalorder %s27, 1
      %p134 = por %p132, %p133
      %p136 = scmp.ne.s32.totalorder %s121, %s135
      %p137 = scmp.eq.s32.totalorder %s27, 0
      %p138 = por %p136, %p137
      %s140 = sadd.s32 %s139, 1
      %p143 = scmp.eq.s32.totalorder %s21, 1
      %p144 = scmp.ne.s32.totalorder %s139, %s141
      %p145 = scmp.eq.s32.totalorder %s21, 0
      %p146 = por %p144, %p145
      %p147 = scmp.ne.s32.totalorder %s139, %s141
      %p148 = scmp.eq.s32.totalorder %s26, 1
      %p149 = por %p147, %p148
      %p150 = scmp.ne.s32.totalorder %s141, %s142
      %p151 = scmp.eq.s32.totalorder %s26, 0
      %p152 = por %p150, %p151
      %p153 = scmp.ne.s32.totalorder %s141, %s142
      %p154 = scmp.eq.s32.totalorder %s27, 1
      %p155 = por %p153, %p154
      %p157 = scmp.ne.s32.totalorder %s142, %s156
      %p158 = scmp.eq.s32.totalorder %s27, 0
      %p159 = por %p157, %p158
      %s161 = sadd.s32 %s160, 1
      %p164 = scmp.eq.s32.totalorder %s21, 1
      %p165 = scmp.ne.s32.totalorder %s160, %s162
      %p166 = scmp.eq.s32.totalorder %s21, 0
      %p167 = por %p165, %p166
      %p168 = scmp.ne.s32.totalorder %s160, %s162
      %p169 = scmp.eq.s32.totalorder %s26, 1
      %p170 = por %p168, %p169
      %p171 = scmp.ne.s32.totalorder %s162, %s163
      %p172 = scmp.eq.s32.totalorder %s26, 0
      %p173 = por %p171, %p172
      %p174 = scmp.ne.s32.totalorder %s162, %s163
      %p175 = scmp.eq.s32.totalorder %s27, 1
      %p176 = por %p174, %p175
      %p178 = scmp.ne.s32.totalorder %s163, %s177
      %p179 = scmp.eq.s32.totalorder %s27, 0
      %p180 = por %p178, %p179
      %s182 = sadd.s32 %s181, 1
      %p185 = scmp.eq.s32.totalorder %s21, 1
      %p186 = scmp.ne.s32.totalorder %s181, %s183
      %p187 = scmp.eq.s32.totalorder %s21, 0
      %p188 = por %p186, %p187
      %p189 = scmp.ne.s32.totalorder %s181, %s183
      %p190 = scmp.eq.s32.totalorder %s26, 1
      %p191 = por %p189, %p190
      %p192 = scmp.ne.s32.totalorder %s183, %s184
      %p193 = scmp.eq.s32.totalorder %s26, 0
      %p194 = por %p192, %p193
      %p195 = scmp.ne.s32.totalorder %s183, %s184
      %p196 = scmp.eq.s32.totalorder %s27, 1
      %p197 = por %p195, %p196
      %p199 = scmp.ne.s32.totalorder %s184, %s198
      %p200 = scmp.eq.s32.totalorder %s27, 0
      %p201 = por %p199, %p200
      %s203 = sadd.s32 %s202, 1
      %p206 = scmp.eq.s32.totalorder %s21, 1
      %p207 = scmp.ne.s32.totalorder %s202, %s204
      %p208 = scmp.eq.s32.totalorder %s21, 0
      %p209 = por %p207, %p208
      %p210 = scmp.ne.s32.totalorder %s202, %s204
      %p211 = scmp.eq.s32.totalorder %s26, 1
      %p212 = por %p210, %p211
      %p213 = scmp.ne.s32.totalorder %s204, %s205
      %p214 = scmp.eq.s32.totalorder %s26, 0
      %p215 = por %p213, %p214
      %p216 = scmp.ne.s32.totalorder %s204, %s205
      %p217 = scmp.eq.s32.totalorder %s27, 1
      %p218 = por %p216, %p217
      %p220 = scmp.ne.s32.totalorder %s205, %s219
      %p221 = scmp.eq.s32.totalorder %s27, 0
      %p222 = por %p220, %p221
      %s224 = sadd.s32 %s223, 1
      %p227 = scmp.eq.s32.totalorder %s21, 1
      %p228 = scmp.ne.s32.totalorder %s223, %s225
      %p229 = scmp.eq.s32.totalorder %s21, 0
      %p230 = por %p228, %p229
      %p231 = scmp.ne.s32.totalorder %s223, %s225
      %p232 = scmp.eq.s32.totalorder %s26, 1
      %p233 = por %p231, %p232
      %p234 = scmp.ne.s32.totalorder %s225, %s226
      %p235 = scmp.eq.s32.totalorder %s26, 0
      %p236 = por %p234, %p235
      %p237 = scmp.ne.s32.totalorder %s225, %s226
      %p238 = scmp.eq.s32.totalorder %s27, 1
      %p239 = por %p237, %p238
      %p241 = scmp.ne.s32.totalorder %s226, %s240
      %p242 = scmp.eq.s32.totalorder %s27, 0
      %p243 = por %p241, %p242
      %s245 = sadd.s32 %s244, 1
      %p248 = scmp.eq.s32.totalorder %s21, 1
      %p249 = scmp.ne.s32.totalorder %s244, %s246
      %p250 = scmp.eq.s32.totalorder %s21, 0
      %p251 = por %p249, %p250
      %p252 = scmp.ne.s32.totalorder %s244, %s246
      %p253 = scmp.eq.s32.totalorder %s26, 1
      %p254 = por %p252, %p253
      %p255 = scmp.ne.s32.totalorder %s246, %s247
      %p256 = scmp.eq.s32.totalorder %s26, 0
      %p257 = por %p255, %p256
      %p258 = scmp.ne.s32.totalorder %s246, %s247
      %p259 = scmp.eq.s32.totalorder %s27, 1
      %p260 = por %p258, %p259
      %p262 = scmp.ne.s32.totalorder %s247, %s261
      %p263 = scmp.eq.s32.totalorder %s27, 0
      %p264 = por %p262, %p263
      %s266 = sadd.s32 %s265, 1
      %p269 = scmp.eq.s32.totalorder %s21, 1
      %p270 = scmp.ne.s32.totalorder %s265, %s267
      %p271 = scmp.eq.s32.totalorder %s21, 0
      %p272 = por %p270, %p271
      %p273 = scmp.ne.s32.totalorder %s265, %s267
      %p274 = scmp.eq.s32.totalorder %s26, 1
      %p275 = por %p273, %p274
      %p276 = scmp.ne.s32.totalorder %s267, %s268
      %p277 = scmp.eq.s32.totalorder %s26, 0
      %p278 = por %p276, %p277
      %p279 = scmp.ne.s32.totalorder %s267, %s268
      %p280 = scmp.eq.s32.totalorder %s27, 1
      %p281 = por %p279, %p280
      %p283 = scmp.ne.s32.totalorder %s268, %s282
      %p284 = scmp.eq.s32.totalorder %s27, 0
      %p285 = por %p283, %p284
      %s286 = ssub.s32 %s21, %s28
      %p287 = scmp.eq.s32.totalorder %s286, 0
      %s289 = sadd.s32 %s288, 1
      %s290 = scalar_select %p287, %s288, %s289
      %p293 = pneg %p287
      %p294 = scmp.eq.s32.totalorder %s21, 1
      %p295 = por %p293, %p294
      %p296 = scmp.ne.s32.totalorder %s288, %s291
      %p297 = scmp.eq.s32.totalorder %s21, 0
      %p298 = por %p296, %p297
      %p299 = scmp.ne.s32.totalorder %s288, %s291
      %p300 = scmp.eq.s32.totalorder %s26, 1
      %p301 = por %p299, %p300
      %p302 = scmp.ne.s32.totalorder %s291, %s292
      %p303 = scmp.eq.s32.totalorder %s26, 0
      %p304 = por %p302, %p303
      %p305 = scmp.ne.s32.totalorder %s291, %s292
      %p306 = scmp.eq.s32.totalorder %s27, 1
      %p307 = por %p305, %p306
      %p309 = scmp.ne.s32.totalorder %s292, %s308
      %p310 = scmp.eq.s32.totalorder %s27, 0
      %p311 = por %p309, %p310
      %p312 = scmp.le.s32.totalorder 1, %s21
      %p313 = scmp.lt.s32.totalorder %s21, 3
      %p314 = pnand %p312, %p313
      %p315 = pneg %p314
      // Predicated region
      $region9: #{tpu_custom_call.1} parent=5 // pred_check
        _
      $region10: #{tpu_custom_call.1} parent=5 // pred_check_branch
        %317 = sbr.rel (%p314) target = $region12
      $region11: #{tpu_custom_call.1} parent=5 // pred_region
        %s318 = ssub.s32 %s21, 1
        // Predicated region
        $region13: #{tpu_custom_call.1} parent=11 // pred_check
          %p319 = pneg %p68
        $region14: #{tpu_custom_call.1} parent=11 // pred_check_branch
          %321 = sbr.rel (%p319) target = $region16
        $region15: #{tpu_custom_call.1} parent=11 // pred_region
          _
        $region16: #{tpu_custom_call.1} parent=11 // pred_fallthru
          _
        // Predicated region
        $region17: #{tpu_custom_call.1} parent=11 // pred_check
          %p322 = pneg %p89
        $region18: #{tpu_custom_call.1} parent=11 // pred_check_branch
          %324 = sbr.rel (%p322) target = $region20
        $region19: #{tpu_custom_call.1} parent=11 // pred_region
          _
        $region20: #{tpu_custom_call.1} parent=11 // pred_fallthru
          _
        // Predicated region
        $region21: #{tpu_custom_call.1} parent=11 // pred_check
          %p325 = pneg %p110
        $region22: #{tpu_custom_call.1} parent=11 // pred_check_branch
          %327 = sbr.rel (%p325) target = $region24
        $region23: #{tpu_custom_call.1} parent=11 // pred_region
          _
        $region24: #{tpu_custom_call.1} parent=11 // pred_fallthru
          _
        // Predicated region
        $region25: #{tpu_custom_call.1} parent=11 // pred_check
          %p328 = pneg %p131
        $region26: #{tpu_custom_call.1} parent=11 // pred_check_branch
          %330 = sbr.rel (%p328) target = $region28
        $region27: #{tpu_custom_call.1} parent=11 // pred_region
          _
        $region28: #{tpu_custom_call.1} parent=11 // pred_fallthru
          _
        // Predicated region
        $region29: #{tpu_custom_call.1} parent=11 // pred_check
          %p331 = pneg %p152
        $region30: #{tpu_custom_call.1} parent=11 // pred_check_branch
          %333 = sbr.rel (%p331) target = $region32
        $region31: #{tpu_custom_call.1} parent=11 // pred_region
          _
        $region32: #{tpu_custom_call.1} parent=11 // pred_fallthru
          _
        // Predicated region
        $region33: #{tpu_custom_call.1} parent=11 // pred_check
          %p334 = pneg %p173
        $region34: #{tpu_custom_call.1} parent=11 // pred_check_branch
          %336 = sbr.rel (%p334) target = $region36
        $region35: #{tpu_custom_call.1} parent=11 // pred_region
          _
        $region36: #{tpu_custom_call.1} parent=11 // pred_fallthru
          _
        // Predicated region
        $region37: #{tpu_custom_call.1} parent=11 // pred_check
          %p337 = pneg %p194
        $region38: #{tpu_custom_call.1} parent=11 // pred_check_branch
          %339 = sbr.rel (%p337) target = $region40
        $region39: #{tpu_custom_call.1} parent=11 // pred_region
          _
        $region40: #{tpu_custom_call.1} parent=11 // pred_fallthru
          _
        // Predicated region
        $region41: #{tpu_custom_call.1} parent=11 // pred_check
          %p340 = pneg %p215
        $region42: #{tpu_custom_call.1} parent=11 // pred_check_branch
          %342 = sbr.rel (%p340) target = $region44
        $region43: #{tpu_custom_call.1} parent=11 // pred_region
          _
        $region44: #{tpu_custom_call.1} parent=11 // pred_fallthru
          _
        // Predicated region
        $region45: #{tpu_custom_call.1} parent=11 // pred_check
          %p343 = pneg %p236
        $region46: #{tpu_custom_call.1} parent=11 // pred_check_branch
          %345 = sbr.rel (%p343) target = $region48
        $region47: #{tpu_custom_call.1} parent=11 // pred_region
          _
        $region48: #{tpu_custom_call.1} parent=11 // pred_fallthru
          _
        // Predicated region
        $region49: #{tpu_custom_call.1} parent=11 // pred_check
          %p346 = pneg %p257
        $region50: #{tpu_custom_call.1} parent=11 // pred_check_branch
          %348 = sbr.rel (%p346) target = $region52
        $region51: #{tpu_custom_call.1} parent=11 // pred_region
          _
        $region52: #{tpu_custom_call.1} parent=11 // pred_fallthru
          _
        // Predicated region
        $region53: #{tpu_custom_call.1} parent=11 // pred_check
          %p349 = pneg %p278
        $region54: #{tpu_custom_call.1} parent=11 // pred_check_branch
          %351 = sbr.rel (%p349) target = $region56
        $region55: #{tpu_custom_call.1} parent=11 // pred_region
          _
        $region56: #{tpu_custom_call.1} parent=11 // pred_fallthru
          _
      $region12: #{tpu_custom_call.1} parent=5 // pred_fallthru
        _
      %p352 = scmp.lt.s32.totalorder %s21, 2
      // Predicated region
      $region57: #{tpu_custom_call.1} parent=5 // pred_check
        %p353 = pneg %p352
      $region58: #{tpu_custom_call.1} parent=5 // pred_check_branch
        %355 = sbr.rel (%p353) target = $region60
      $region59: #{tpu_custom_call.1} parent=5 // pred_region
        // Predicated region
        $region61: #{tpu_custom_call.1} parent=59 // pred_check
          %p356 = pneg %p41
        $region62: #{tpu_custom_call.1} parent=59 // pred_check_branch
          %358 = sbr.rel (%p356) target = $region64
        $region63: #{tpu_custom_call.1} parent=59 // pred_region
          %p359 = scmp.lt.s32.totalorder %s21, 1
          %s360 = scalar_select %p359, %s21, 1
          %s361 = smul.addr %s360, 8
          %s362 = scalar_lea.vmem %s0, %s361
        $region64: #{tpu_custom_call.1} parent=59 // pred_fallthru
          _
      $region60: #{tpu_custom_call.1} parent=5 // pred_fallthru
        _
      %p363 = scmp.le.s32.totalorder 1, %s21
      %p364 = scmp.lt.s32.totalorder %s21, 3
      %p365 = pnand %p363, %p364
      %p366 = pneg %p365
      // Predicated region
      $region65: #{tpu_custom_call.1} parent=5 // pred_check
        _
      $region66: #{tpu_custom_call.1} parent=5 // pred_check_branch
        %368 = sbr.rel (%p365) target = $region68
      $region67: #{tpu_custom_call.1} parent=5 // pred_region
        %s369 = ssub.s32 %s21, 1
        %p370 = scmp.lt.s32.totalorder %s26, 1
        %s371 = scalar_select %p370, %s26, 1
        %s372 = smul.addr %s371, 8
        %s373 = scalar_lea.vmem %s0, %s372
        %p374 = pneg %p47
        %p375 = pneg %p44
        %p376 = pneg %p68
        %p377 = pneg %p65
        %p378 = pneg %p89
        %p379 = pneg %p86
        %p380 = pneg %p110
        %p381 = pneg %p107
        %p382 = pneg %p131
        %p383 = pneg %p128
        %p384 = pneg %p152
        %p385 = pneg %p149
        %p386 = pneg %p173
        %p387 = pneg %p170
        %p388 = pneg %p194
        %p389 = pneg %p191
        %p390 = pneg %p215
        %p391 = pneg %p212
        %p392 = pneg %p236
        %p393 = pneg %p233
        %p394 = pneg %p257
        %p395 = pneg %p254
        %p396 = pneg %p278
        %p397 = pneg %p275
        %p398 = pneg %p304
        %p399 = pneg %p301
        %s400 = sand.u32 %s291, 1
        %s401 = scalar_lea.sflag [#allocation4], %s400
        %s402 = sand.u32 %s291, 1
        %s403 = smul.addr %s402, 8
        %s404 = scalar_lea.vmem [#allocation3], %s403
        %p405 = scmp.lt.s32.totalorder %s26, 1
        %s406 = scalar_select %p405, %s26, 1
        %s407 = smul.addr %s406, 8
        %s408 = scalar_lea.vmem %s0, %s407
        %v409 = vld [vmem:[%s408] sm:$0xff]
        %v410 = vld [vmem:[%s4] sm:$0x1]
        %v411 = vld [vmem:[%s5] sm:$0x1]
        %vm412 = vcmask 261120
        %v413 = vsel %vm412, %v409, 0.0
        %414 = vadd.xlane.f32.xlu0 %v413
        %v415 = vpop.xlane.xlu0 %414
        %v416 = vrcp.pop 32.0
        %v417 = vmul.f32 %v415, %v416
        %v418 = vsub.f32 %v409, %v417
        %v419 = vmul.f32 %v418, %v418
        %v420 = vsel %vm412, %v419, 0.0
        %421 = vadd.xlane.f32.xlu0 %v420
        %v422 = vpop.xlane.xlu0 %421
        %v423 = vmul.f32 %v422, %v416
        %v424 = vadd.f32 %v423, 1e-05
        %v425 = vrsqrt.pop %v424
        %v426 = vmul.f32 %v418, %v425
        %v428 = vlaneseq
        %v429 = vshrl.u32 %v428, 7
        %v430 = vsub.s32 0, %v429
        %v431 = vrot.slane %v410, %v430
        %v433 = vmul.f32 %v426, %v431
        %v435 = vlaneseq
        %v436 = vshrl.u32 %v435, 7
        %v437 = vsub.s32 0, %v436
        %v438 = vrot.slane %v411, %v437
        %v440 = vadd.f32 %v433, %v438
        %v441 = vld [vmem:[%s1] sm:$0xff]
        %v442 = vld [vmem:[%s1 + $0x8] sm:$0xff]
        %v443 = vld [vmem:[%s1 + $0x10] sm:$0xff]
        %v444 = vld [vmem:[%s1 + $0x18] sm:$0xff]
        %v446 = vsel %vm412, %v440, 0
        %448 = vmatprep.subr.mxu0 0.0
        %449 = vmatpush1.msra.mxu0 0.0
        %450 = vmatprep.subr.mxu0 0.0
        %451 = vmatpush1.msra.mxu0 0.0
        %452 = vmatprep.subr.mxu0 0.0
        %453 = vmatpush1.msra.mxu0 0.0
        %454 = vmatprep.subr.mxu0 0.0
        %455 = vmatpush1.msra.mxu0 0.0
        %456 = vmatprep.subr.mxu0 0.0
        %457 = vmatpush1.msra.mxu0 0.0
        %458 = vmatprep.subr.mxu0 0.0
        %459 = vmatpush1.msra.mxu0 0.0
        %460 = vmatprep.subr.mxu0 0.0
        %461 = vmatpush1.msra.mxu0 0.0
        %462 = vmatprep.subr.mxu0 0.0
        %463 = vmatpush1.msra.mxu0 0.0
        %464 = vmatprep.subr.mxu0 0.0
        %465 = vmatpush1.msra.mxu0 0.0
        %466 = vmatprep.subr.mxu0 0.0
        %467 = vmatpush1.msra.mxu0 0.0
        %468 = vmatprep.subr.mxu0 0.0
        %469 = vmatpush1.msra.mxu0 0.0
        %470 = vmatprep.subr.mxu0 0.0
        %471 = vmatpush1.msra.mxu0 0.0
        %472 = vmatprep.subr.mxu0 0.0
        %473 = vmatpush1.msra.mxu0 %v444
        %474 = vmatprep.subr.mxu0 0.0
        %475 = vmatpush1.msra.mxu0 %v443
        %476 = vmatprep.subr.mxu0 0.0
        %477 = vmatpush1.msra.mxu0 %v442
        %478 = vmatprep.subr.mxu0 0.0
        %479 = vmatpush1.msra.mxu0 %v441
        %480 = vmatprep.subr.mxu0 0.0
        %481 = vmatpush2.msra.mxu0 0.0
        %482 = vmatprep.subr.mxu0 0.0
        %483 = vmatpush2.msra.mxu0 0.0
        %484 = vmatprep.subr.mxu0 0.0
        %485 = vmatpush2.msra.mxu0 0.0
        %486 = vmatprep.subr.mxu0 0.0
        %487 = vmatpush2.msra.mxu0 0.0
        %488 = vmatprep.subr.mxu0 0.0
        %489 = vmatpush2.msra.mxu0 0.0
        %490 = vmatprep.subr.mxu0 0.0
        %491 = vmatpush2.msra.mxu0 0.0
        %492 = vmatprep.subr.mxu0 0.0
        %493 = vmatpush2.msra.mxu0 0.0
        %494 = vmatprep.subr.mxu0 0.0
        %495 = vmatpush2.msra.mxu0 0.0
        %496 = vmatprep.subr.mxu0 0.0
        %497 = vmatpush2.msra.mxu0 0.0
        %498 = vmatprep.subr.mxu0 0.0
        %499 = vmatpush2.msra.mxu0 0.0
        %500 = vmatprep.subr.mxu0 0.0
        %501 = vmatpush2.msra.mxu0 0.0
        %502 = vmatprep.subr.mxu0 0.0
        %503 = vmatpush2.msra.mxu0 0.0
        %504 = vmatprep.subr.mxu0 0.0
        %505 = vmatpush2.msra.mxu0 0.0
        %506 = vmatprep.subr.mxu0 0.0
        %507 = vmatpush2.msra.mxu0 0.0
        %508 = vmatprep.subr.mxu0 0.0
        %509 = vmatpush2.msra.mxu0 0.0
        %510 = vmatprep.subr.mxu0 0.0
        %511 = vmatpush2.msra.mxu0 0.0
        %512 = vmatprep.mubr.f32.mxu0 0.0
        %513 = vmatmul.mubr.f32.gmra.mxu0 %v446
        %v514 = vpop.f32.mrf.mxu0
        %v515 = vadd.f32 0.0, %v514
        %v516 = vpop.f32.mrf.mxu0
        %517 = vdwg.mxu0
        %v518 = vmul.f32 %v515, 0.35355338
        %520 = vrot.lane.b32.xlu0 %v518, 120
        %v521 = vpop.permute.xlu0 %520
        %523 = vrot.lane.b32.xlu0 %v518, 112
        %v524 = vpop.permute.xlu0 %523
        %526 = vrot.lane.b32.xlu0 %v518, 104
        %v527 = vpop.permute.xlu0 %526
        %v529 = vcombine.low %v518, %v524
        %v530 = vcombine.high %v518, %v524
        %v532 = vunpack.c.l.s4 1983009808
        %v533 = vunpack.c.0.s8 %v532
        %v534 = vlaneseq
        %v535 = vshrl.u32 %v534, 7
        %v536 = vsub.s32 %v533, %v535
        %v537 = vrot.slane %v529, %v536
        %v539 = vunpack.c.l.s4 1983009808
        %v540 = vunpack.c.0.s8 %v539
        %v541 = vlaneseq
        %v542 = vshrl.u32 %v541, 7
        %v543 = vsub.s32 %v540, %v542
        %v544 = vrot.slane %v530, %v543
        %v545 = vcombine.low %v521, %v527
        %v546 = vcombine.high %v521, %v527
        %v548 = vunpack.c.l.s4 1983009808
        %v549 = vunpack.c.0.s8 %v548
        %v550 = vlaneseq
        %v551 = vshrl.u32 %v550, 7
        %v552 = vsub.s32 %v549, %v551
        %v553 = vrot.slane %v545, %v552
        %v555 = vunpack.c.l.s4 1983009808
        %v556 = vunpack.c.0.s8 %v555
        %v557 = vlaneseq
        %v558 = vshrl.u32 %v557, 7
        %v559 = vsub.s32 %v556, %v558
        %v560 = vrot.slane %v546, %v559
        %v561 = vcombine.low %v537, %v553
        %v562 = vcombine.high %v537, %v553
        %v564 = vunpack.c.l.s4 1934713408
        %v565 = vunpack.c.0.s8 %v564
        %v566 = vlaneseq
        %v567 = vshrl.u32 %v566, 7
        %v568 = vsub.s32 %v565, %v567
        %v569 = vrot.slane %v561, %v568
        %v571 = vunpack.c.l.s4 1934713408
        %v572 = vunpack.c.0.s8 %v571
        %v573 = vlaneseq
        %v574 = vshrl.u32 %v573, 7
        %v575 = vsub.s32 %v572, %v574
        %v576 = vrot.slane %v562, %v575
        %v577 = vcombine.low %v544, %v560
        %v578 = vcombine.high %v544, %v560
        %v580 = vunpack.c.l.s4 1934713408
        %v581 = vunpack.c.0.s8 %v580
        %v582 = vlaneseq
        %v583 = vshrl.u32 %v582, 7
        %v584 = vsub.s32 %v581, %v583
        %v585 = vrot.slane %v577, %v584
        %v587 = vunpack.c.l.s4 1934713408
        %v588 = vunpack.c.0.s8 %v587
        %v589 = vlaneseq
        %v590 = vshrl.u32 %v589, 7
        %v591 = vsub.s32 %v588, %v590
        %v592 = vrot.slane %v578, %v591
        %v593 = vcombine.high %v569, 0.0
        %v594 = vcombine.high %v576, 0.0
        %v595 = vcombine.high %v585, 0.0
        %v596 = vcombine.high %v592, 0.0
        %v597 = vcombine.low %v569, %v576
        %v599 = vunpack.c.l.s4 1983009808
        %v600 = vunpack.c.0.s8 %v599
        %v601 = vlaneseq
        %v602 = vshrl.u32 %v601, 7
        %v603 = vsub.s32 %v600, %v602
        %v604 = vrot.slane %v597, %v603
        %v605 = vcombine.low %v593, %v594
        %v607 = vunpack.c.l.s4 1983009808
        %v608 = vunpack.c.0.s8 %v607
        %v609 = vlaneseq
        %v610 = vshrl.u32 %v609, 7
        %v611 = vsub.s32 %v608, %v610
        %v612 = vrot.slane %v605, %v611
        %v613 = vcombine.low %v585, %v592
        %v615 = vunpack.c.l.s4 1983009808
        %v616 = vunpack.c.0.s8 %v615
        %v617 = vlaneseq
        %v618 = vshrl.u32 %v617, 7
        %v619 = vsub.s32 %v616, %v618
        %v620 = vrot.slane %v613, %v619
        %v621 = vcombine.low %v595, %v596
        %v623 = vunpack.c.l.s4 1983009808
        %v624 = vunpack.c.0.s8 %v623
        %v625 = vlaneseq
        %v626 = vshrl.u32 %v625, 7
        %v627 = vsub.s32 %v624, %v626
        %v628 = vrot.slane %v621, %v627
        %v629 = vcombine.low %v604, %v612
        %v630 = vcombine.high %v604, %v612
        %v632 = vunpack.c.l.s4 1934713408
        %v633 = vunpack.c.0.s8 %v632
        %v634 = vlaneseq
        %v635 = vshrl.u32 %v634, 7
        %v636 = vsub.s32 %v633, %v635
        %v637 = vrot.slane %v629, %v636
        %v639 = vunpack.c.l.s4 1934713408
        %v640 = vunpack.c.0.s8 %v639
        %v641 = vlaneseq
        %v642 = vshrl.u32 %v641, 7
        %v643 = vsub.s32 %v640, %v642
        %v644 = vrot.slane %v630, %v643
        %v645 = vcombine.low %v620, %v628
        %v646 = vcombine.high %v620, %v628
        %v648 = vunpack.c.l.s4 1934713408
        %v649 = vunpack.c.0.s8 %v648
        %v650 = vlaneseq
        %v651 = vshrl.u32 %v650, 7
        %v652 = vsub.s32 %v649, %v651
        %v653 = vrot.slane %v645, %v652
        %v655 = vunpack.c.l.s4 1934713408
        %v656 = vunpack.c.0.s8 %v655
        %v657 = vlaneseq
        %v658 = vshrl.u32 %v657, 7
        %v659 = vsub.s32 %v656, %v658
        %v660 = vrot.slane %v646, %v659
        %v661 = vcombine.low %v637, %v653
        %v662 = vcombine.high %v637, %v653
        %v663 = vcombine.low %v644, %v660
        %v664 = vcombine.high %v644, %v660
        %666 = vrot.lane.b32.xlu0 %v515, 120
        %v667 = vpop.permute.xlu0 %666
        %668 = vrot.lane.b32.xlu0 %v515, 112
        %v669 = vpop.permute.xlu0 %668
        %670 = vrot.lane.b32.xlu0 %v515, 104
        %v671 = vpop.permute.xlu0 %670
        %672 = vrot.lane.b32.xlu0 %v515, 96
        %v673 = vpop.permute.xlu0 %672
        %674 = vrot.lane.b32.xlu0 %v667, 96
        %v675 = vpop.permute.xlu0 %674
        %676 = vrot.lane.b32.xlu0 %v669, 96
        %v677 = vpop.permute.xlu0 %676
        %678 = vrot.lane.b32.xlu0 %v671, 96
        %v679 = vpop.permute.xlu0 %678
        %v684 = vcombine.low %v673, %v677
        %v685 = vcombine.high %v673, %v677
        %v687 = vunpack.c.l.s4 1983009808
        %v688 = vunpack.c.0.s8 %v687
        %v689 = vlaneseq
        %v690 = vshrl.u32 %v689, 7
        %v691 = vsub.s32 %v688, %v690
        %v692 = vrot.slane %v684, %v691
        %v694 = vunpack.c.l.s4 1983009808
        %v695 = vunpack.c.0.s8 %v694
        %v696 = vlaneseq
        %v697 = vshrl.u32 %v696, 7
        %v698 = vsub.s32 %v695, %v697
        %v699 = vrot.slane %v685, %v698
        %v700 = vcombine.low %v675, %v679
        %v701 = vcombine.high %v675, %v679
        %v703 = vunpack.c.l.s4 1983009808
        %v704 = vunpack.c.0.s8 %v703
        %v705 = vlaneseq
        %v706 = vshrl.u32 %v705, 7
        %v707 = vsub.s32 %v704, %v706
        %v708 = vrot.slane %v700, %v707
        %v710 = vunpack.c.l.s4 1983009808
        %v711 = vunpack.c.0.s8 %v710
        %v712 = vlaneseq
        %v713 = vshrl.u32 %v712, 7
        %v714 = vsub.s32 %v711, %v713
        %v715 = vrot.slane %v701, %v714
        %v716 = vcombine.low %v692, %v708
        %v717 = vcombine.high %v692, %v708
        %v719 = vunpack.c.l.s4 1934713408
        %v720 = vunpack.c.0.s8 %v719
        %v721 = vlaneseq
        %v722 = vshrl.u32 %v721, 7
        %v723 = vsub.s32 %v720, %v722
        %v724 = vrot.slane %v716, %v723
        %v726 = vunpack.c.l.s4 1934713408
        %v727 = vunpack.c.0.s8 %v726
        %v728 = vlaneseq
        %v729 = vshrl.u32 %v728, 7
        %v730 = vsub.s32 %v727, %v729
        %v731 = vrot.slane %v717, %v730
        %v732 = vcombine.low %v699, %v715
        %v733 = vcombine.high %v699, %v715
        %v735 = vunpack.c.l.s4 1934713408
        %v736 = vunpack.c.0.s8 %v735
        %v737 = vlaneseq
        %v738 = vshrl.u32 %v737, 7
        %v739 = vsub.s32 %v736, %v738
        %v740 = vrot.slane %v732, %v739
        %v742 = vunpack.c.l.s4 1934713408
        %v743 = vunpack.c.0.s8 %v742
        %v744 = vlaneseq
        %v745 = vshrl.u32 %v744, 7
        %v746 = vsub.s32 %v743, %v745
        %v747 = vrot.slane %v733, %v746
        %v748 = vcombine.high %v724, 0.0
        %v749 = vcombine.high %v731, 0.0
        %v750 = vcombine.high %v740, 0.0
        %v751 = vcombine.high %v747, 0.0
        %v752 = vcombine.low %v724, %v731
        %v754 = vunpack.c.l.s4 1983009808
        %v755 = vunpack.c.0.s8 %v754
        %v756 = vlaneseq
        %v757 = vshrl.u32 %v756, 7
        %v758 = vsub.s32 %v755, %v757
        %v759 = vrot.slane %v752, %v758
        %v760 = vcombine.low %v748, %v749
        %v762 = vunpack.c.l.s4 1983009808
        %v763 = vunpack.c.0.s8 %v762
        %v764 = vlaneseq
        %v765 = vshrl.u32 %v764, 7
        %v766 = vsub.s32 %v763, %v765
        %v767 = vrot.slane %v760, %v766
        %v768 = vcombine.low %v740, %v747
        %v770 = vunpack.c.l.s4 1983009808
        %v771 = vunpack.c.0.s8 %v770
        %v772 = vlaneseq
        %v773 = vshrl.u32 %v772, 7
        %v774 = vsub.s32 %v771, %v773
        %v775 = vrot.slane %v768, %v774
        %v776 = vcombine.low %v750, %v751
        %v778 = vunpack.c.l.s4 1983009808
        %v779 = vunpack.c.0.s8 %v778
        %v780 = vlaneseq
        %v781 = vshrl.u32 %v780, 7
        %v782 = vsub.s32 %v779, %v781
        %v783 = vrot.slane %v776, %v782
        %v784 = vcombine.low %v759, %v767
        %v785 = vcombine.high %v759, %v767
        %v787 = vunpack.c.l.s4 1934713408
        %v788 = vunpack.c.0.s8 %v787
        %v789 = vlaneseq
        %v790 = vshrl.u32 %v789, 7
        %v791 = vsub.s32 %v788, %v790
        %v792 = vrot.slane %v784, %v791
        %v794 = vunpack.c.l.s4 1934713408
        %v795 = vunpack.c.0.s8 %v794
        %v796 = vlaneseq
        %v797 = vshrl.u32 %v796, 7
        %v798 = vsub.s32 %v795, %v797
        %v799 = vrot.slane %v785, %v798
        %v800 = vcombine.low %v775, %v783
        %v801 = vcombine.high %v775, %v783
        %v803 = vunpack.c.l.s4 1934713408
        %v804 = vunpack.c.0.s8 %v803
        %v805 = vlaneseq
        %v806 = vshrl.u32 %v805, 7
        %v807 = vsub.s32 %v804, %v806
        %v808 = vrot.slane %v800, %v807
        %v810 = vunpack.c.l.s4 1934713408
        %v811 = vunpack.c.0.s8 %v810
        %v812 = vlaneseq
        %v813 = vshrl.u32 %v812, 7
        %v814 = vsub.s32 %v811, %v813
        %v815 = vrot.slane %v801, %v814
        %v816 = vcombine.low %v792, %v808
        %v817 = vcombine.high %v792, %v808
        %v818 = vcombine.low %v799, %v815
        %v819 = vcombine.high %v799, %v815
        %820 = vrot.lane.b32.xlu0 %v515, 64
        %v821 = vpop.permute.xlu0 %820
        %822 = vrot.lane.b32.xlu0 %v667, 64
        %v823 = vpop.permute.xlu0 %822
        %824 = vrot.lane.b32.xlu0 %v669, 64
        %v825 = vpop.permute.xlu0 %824
        %826 = vrot.lane.b32.xlu0 %v671, 64
        %v827 = vpop.permute.xlu0 %826
        %v832 = vcombine.low %v821, %v825
        %v833 = vcombine.high %v821, %v825
        %v835 = vunpack.c.l.s4 1983009808
        %v836 = vunpack.c.0.s8 %v835
        %v837 = vlaneseq
        %v838 = vshrl.u32 %v837, 7
        %v839 = vsub.s32 %v836, %v838
        %v840 = vrot.slane %v832, %v839
        %v842 = vunpack.c.l.s4 1983009808
        %v843 = vunpack.c.0.s8 %v842
        %v844 = vlaneseq
        %v845 = vshrl.u32 %v844, 7
        %v846 = vsub.s32 %v843, %v845
        %v847 = vrot.slane %v833, %v846
        %v848 = vcombine.low %v823, %v827
        %v849 = vcombine.high %v823, %v827
        %v851 = vunpack.c.l.s4 1983009808
        %v852 = vunpack.c.0.s8 %v851
        %v853 = vlaneseq
        %v854 = vshrl.u32 %v853, 7
        %v855 = vsub.s32 %v852, %v854
        %v856 = vrot.slane %v848, %v855
        %v858 = vunpack.c.l.s4 1983009808
        %v859 = vunpack.c.0.s8 %v858
        %v860 = vlaneseq
        %v861 = vshrl.u32 %v860, 7
        %v862 = vsub.s32 %v859, %v861
        %v863 = vrot.slane %v849, %v862
        %v864 = vcombine.low %v840, %v856
        %v865 = vcombine.high %v840, %v856
        %v867 = vunpack.c.l.s4 1934713408
        %v868 = vunpack.c.0.s8 %v867
        %v869 = vlaneseq
        %v870 = vshrl.u32 %v869, 7
        %v871 = vsub.s32 %v868, %v870
        %v872 = vrot.slane %v864, %v871
        %v874 = vunpack.c.l.s4 1934713408
        %v875 = vunpack.c.0.s8 %v874
        %v876 = vlaneseq
        %v877 = vshrl.u32 %v876, 7
        %v878 = vsub.s32 %v875, %v877
        %v879 = vrot.slane %v865, %v878
        %v880 = vcombine.low %v847, %v863
        %v881 = vcombine.high %v847, %v863
        %v883 = vunpack.c.l.s4 1934713408
        %v884 = vunpack.c.0.s8 %v883
        %v885 = vlaneseq
        %v886 = vshrl.u32 %v885, 7
        %v887 = vsub.s32 %v884, %v886
        %v888 = vrot.slane %v880, %v887
        %v890 = vunpack.c.l.s4 1934713408
        %v891 = vunpack.c.0.s8 %v890
        %v892 = vlaneseq
        %v893 = vshrl.u32 %v892, 7
        %v894 = vsub.s32 %v891, %v893
        %v895 = vrot.slane %v881, %v894
        %v896 = vcombine.high %v872, 0.0
        %v897 = vcombine.high %v879, 0.0
        %v898 = vcombine.high %v888, 0.0
        %v899 = vcombine.high %v895, 0.0
        %v900 = vcombine.low %v872, %v879
        %v902 = vunpack.c.l.s4 1983009808
        %v903 = vunpack.c.0.s8 %v902
        %v904 = vlaneseq
        %v905 = vshrl.u32 %v904, 7
        %v906 = vsub.s32 %v903, %v905
        %v907 = vrot.slane %v900, %v906
        %v908 = vcombine.low %v896, %v897
        %v910 = vunpack.c.l.s4 1983009808
        %v911 = vunpack.c.0.s8 %v910
        %v912 = vlaneseq
        %v913 = vshrl.u32 %v912, 7
        %v914 = vsub.s32 %v911, %v913
        %v915 = vrot.slane %v908, %v914
        %v916 = vcombine.low %v888, %v895
        %v918 = vunpack.c.l.s4 1983009808
        %v919 = vunpack.c.0.s8 %v918
        %v920 = vlaneseq
        %v921 = vshrl.u32 %v920, 7
        %v922 = vsub.s32 %v919, %v921
        %v923 = vrot.slane %v916, %v922
        %v924 = vcombine.low %v898, %v899
        %v926 = vunpack.c.l.s4 1983009808
        %v927 = vunpack.c.0.s8 %v926
        %v928 = vlaneseq
        %v929 = vshrl.u32 %v928, 7
        %v930 = vsub.s32 %v927, %v929
        %v931 = vrot.slane %v924, %v930
        %v932 = vcombine.low %v907, %v915
        %v933 = vcombine.high %v907, %v915
        %v935 = vunpack.c.l.s4 1934713408
        %v936 = vunpack.c.0.s8 %v935
        %v937 = vlaneseq
        %v938 = vshrl.u32 %v937, 7
        %v939 = vsub.s32 %v936, %v938
        %v940 = vrot.slane %v932, %v939
        %v942 = vunpack.c.l.s4 1934713408
        %v943 = vunpack.c.0.s8 %v942
        %v944 = vlaneseq
        %v945 = vshrl.u32 %v944, 7
        %v946 = vsub.s32 %v943, %v945
        %v947 = vrot.slane %v933, %v946
        %v948 = vcombine.low %v923, %v931
        %v949 = vcombine.high %v923, %v931
        %v951 = vunpack.c.l.s4 1934713408
        %v952 = vunpack.c.0.s8 %v951
        %v953 = vlaneseq
        %v954 = vshrl.u32 %v953, 7
        %v955 = vsub.s32 %v952, %v954
        %v956 = vrot.slane %v948, %v955
        %v958 = vunpack.c.l.s4 1934713408
        %v959 = vunpack.c.0.s8 %v958
        %v960 = vlaneseq
        %v961 = vshrl.u32 %v960, 7
        %v962 = vsub.s32 %v959, %v961
        %v963 = vrot.slane %v949, %v962
        %v964 = vcombine.low %v940, %v956
        %v965 = vcombine.high %v940, %v956
        %v966 = vcombine.low %v947, %v963
        %v967 = vcombine.high %v947, %v963
        %vm968 = vcmask 64512
        %v970 = vsel %vm968, %v661, 0
        %v973 = vsel %vm968, %v816, 0
        %975 = vmatprep.subr.mxu0 0.0
        %976 = vmatpush1.xpose.msra.mxu0 0.0
        %977 = vmatprep.subr.mxu0 0.0
        %978 = vmatpush1.xpose.msra.mxu0 0.0
        %979 = vmatprep.subr.mxu0 0.0
        %980 = vmatpush1.xpose.msra.mxu0 0.0
        %981 = vmatprep.subr.mxu0 0.0
        %982 = vmatpush1.xpose.msra.mxu0 0.0
        %983 = vmatprep.subr.mxu0 0.0
        %984 = vmatpush1.xpose.msra.mxu0 0.0
        %985 = vmatprep.subr.mxu0 0.0
        %986 = vmatpush1.xpose.msra.mxu0 0.0
        %987 = vmatprep.subr.mxu0 0.0
        %988 = vmatpush1.xpose.msra.mxu0 0.0
        %989 = vmatprep.subr.mxu0 0.0
        %990 = vmatpush1.xpose.msra.mxu0 0.0
        %991 = vmatprep.subr.mxu0 0.0
        %992 = vmatpush1.xpose.msra.mxu0 0.0
        %993 = vmatprep.subr.mxu0 0.0
        %994 = vmatpush1.xpose.msra.mxu0 0.0
        %995 = vmatprep.subr.mxu0 0.0
        %996 = vmatpush1.xpose.msra.mxu0 0.0
        %997 = vmatprep.subr.mxu0 0.0
        %998 = vmatpush1.xpose.msra.mxu0 0.0
        %999 = vmatprep.subr.mxu0 0.0
        %1000 = vmatpush1.xpose.msra.mxu0 0.0
        %1001 = vmatprep.subr.mxu0 0.0
        %1002 = vmatpush1.xpose.msra.mxu0 0.0
        %1003 = vmatprep.subr.mxu0 0.0
        %1004 = vmatpush1.xpose.msra.mxu0 0.0
        %1005 = vmatprep.subr.mxu0 0.0
        %1006 = vmatpush1.xpose.msra.mxu0 %v973
        %1007 = vmatprep.subr.mxu0 0.0
        %1008 = vmatpush2.xpose.msra.mxu0 0.0
        %1009 = vmatprep.subr.mxu0 0.0
        %1010 = vmatpush2.xpose.msra.mxu0 0.0
        %1011 = vmatprep.subr.mxu0 0.0
        %1012 = vmatpush2.xpose.msra.mxu0 0.0
        %1013 = vmatprep.subr.mxu0 0.0
        %1014 = vmatpush2.xpose.msra.mxu0 0.0
        %1015 = vmatprep.subr.mxu0 0.0
        %1016 = vmatpush2.xpose.msra.mxu0 0.0
        %1017 = vmatprep.subr.mxu0 0.0
        %1018 = vmatpush2.xpose.msra.mxu0 0.0
        %1019 = vmatprep.subr.mxu0 0.0
        %1020 = vmatpush2.xpose.msra.mxu0 0.0
        %1021 = vmatprep.subr.mxu0 0.0
        %1022 = vmatpush2.xpose.msra.mxu0 0.0
        %1023 = vmatprep.subr.mxu0 0.0
        %1024 = vmatpush2.xpose.msra.mxu0 0.0
        %1025 = vmatprep.subr.mxu0 0.0
        %1026 = vmatpush2.xpose.msra.mxu0 0.0
        %1027 = vmatprep.subr.mxu0 0.0
        %1028 = vmatpush2.xpose.msra.mxu0 0.0
        %1029 = vmatprep.subr.mxu0 0.0
        %1030 = vmatpush2.xpose.msra.mxu0 0.0
        %1031 = vmatprep.subr.mxu0 0.0
        %1032 = vmatpush2.xpose.msra.mxu0 0.0
        %1033 = vmatprep.subr.mxu0 0.0
        %1034 = vmatpush2.xpose.msra.mxu0 0.0
        %1035 = vmatprep.subr.mxu0 0.0
        %1036 = vmatpush2.xpose.msra.mxu0 0.0
        %1037 = vmatprep.subr.mxu0 0.0
        %1038 = vmatpush2.xpose.msra.mxu0 0.0
        %1039 = vmatprep.mubr.f32.mxu0 0.0
        %1040 = vmatmul.mubr.f32.gmra.mxu0 %v970
        %v1041 = vpop.f32.mrf.mxu0
        %v1042 = vadd.f32 0.0, %v1041
        %v1043 = vpop.f32.mrf.mxu0
        %1044 = vdwg.mxu0
        %v1046 = vsel %vm968, %v662, 0
        %v1049 = vsel %vm968, %v817, 0
        %1051 = vmatprep.subr.mxu0 0.0
        %1052 = vmatpush1.xpose.msra.mxu0 0.0
        %1053 = vmatprep.subr.mxu0 0.0
        %1054 = vmatpush1.xpose.msra.mxu0 0.0
        %1055 = vmatprep.subr.mxu0 0.0
        %1056 = vmatpush1.xpose.msra.mxu0 0.0
        %1057 = vmatprep.subr.mxu0 0.0
        %1058 = vmatpush1.xpose.msra.mxu0 0.0
        %1059 = vmatprep.subr.mxu0 0.0
        %1060 = vmatpush1.xpose.msra.mxu0 0.0
        %1061 = vmatprep.subr.mxu0 0.0
        %1062 = vmatpush1.xpose.msra.mxu0 0.0
        %1063 = vmatprep.subr.mxu0 0.0
        %1064 = vmatpush1.xpose.msra.mxu0 0.0
        %1065 = vmatprep.subr.mxu0 0.0
        %1066 = vmatpush1.xpose.msra.mxu0 0.0
        %1067 = vmatprep.subr.mxu0 0.0
        %1068 = vmatpush1.xpose.msra.mxu0 0.0
        %1069 = vmatprep.subr.mxu0 0.0
        %1070 = vmatpush1.xpose.msra.mxu0 0.0
        %1071 = vmatprep.subr.mxu0 0.0
        %1072 = vmatpush1.xpose.msra.mxu0 0.0
        %1073 = vmatprep.subr.mxu0 0.0
        %1074 = vmatpush1.xpose.msra.mxu0 0.0
        %1075 = vmatprep.subr.mxu0 0.0
        %1076 = vmatpush1.xpose.msra.mxu0 0.0
        %1077 = vmatprep.subr.mxu0 0.0
        %1078 = vmatpush1.xpose.msra.mxu0 0.0
        %1079 = vmatprep.subr.mxu0 0.0
        %1080 = vmatpush1.xpose.msra.mxu0 0.0
        %1081 = vmatprep.subr.mxu0 0.0
        %1082 = vmatpush1.xpose.msra.mxu0 %v1049
        %1083 = vmatprep.subr.mxu0 0.0
        %1084 = vmatpush2.xpose.msra.mxu0 0.0
        %1085 = vmatprep.subr.mxu0 0.0
        %1086 = vmatpush2.xpose.msra.mxu0 0.0
        %1087 = vmatprep.subr.mxu0 0.0
        %1088 = vmatpush2.xpose.msra.mxu0 0.0
        %1089 = vmatprep.subr.mxu0 0.0
        %1090 = vmatpush2.xpose.msra.mxu0 0.0
        %1091 = vmatprep.subr.mxu0 0.0
        %1092 = vmatpush2.xpose.msra.mxu0 0.0
        %1093 = vmatprep.subr.mxu0 0.0
        %1094 = vmatpush2.xpose.msra.mxu0 0.0
        %1095 = vmatprep.subr.mxu0 0.0
        %1096 = vmatpush2.xpose.msra.mxu0 0.0
        %1097 = vmatprep.subr.mxu0 0.0
        %1098 = vmatpush2.xpose.msra.mxu0 0.0
        %1099 = vmatprep.subr.mxu0 0.0
        %1100 = vmatpush2.xpose.msra.mxu0 0.0
        %1101 = vmatprep.subr.mxu0 0.0
        %1102 = vmatpush2.xpose.msra.mxu0 0.0
        %1103 = vmatprep.subr.mxu0 0.0
        %1104 = vmatpush2.xpose.msra.mxu0 0.0
        %1105 = vmatprep.subr.mxu0 0.0
        %1106 = vmatpush2.xpose.msra.mxu0 0.0
        %1107 = vmatprep.subr.mxu0 0.0
        %1108 = vmatpush2.xpose.msra.mxu0 0.0
        %1109 = vmatprep.subr.mxu0 0.0
        %1110 = vmatpush2.xpose.msra.mxu0 0.0
        %1111 = vmatprep.subr.mxu0 0.0
        %1112 = vmatpush2.xpose.msra.mxu0 0.0
        %1113 = vmatprep.subr.mxu0 0.0
        %1114 = vmatpush2.xpose.msra.mxu0 0.0
        %1115 = vmatprep.mubr.f32.mxu0 0.0
        %1116 = vmatmul.mubr.f32.gmra.mxu0 %v1046
        %v1117 = vpop.f32.mrf.mxu0
        %v1118 = vadd.f32 0.0, %v1117
        %v1119 = vpop.f32.mrf.mxu0
        %1120 = vdwg.mxu0
        %v1122 = vsel %vm968, %v663, 0
        %v1125 = vsel %vm968, %v818, 0
        %1127 = vmatprep.subr.mxu0 0.0
        %1128 = vmatpush1.xpose.msra.mxu0 0.0
        %1129 = vmatprep.subr.mxu0 0.0
        %1130 = vmatpush1.xpose.msra.mxu0 0.0
        %1131 = vmatprep.subr.mxu0 0.0
        %1132 = vmatpush1.xpose.msra.mxu0 0.0
        %1133 = vmatprep.subr.mxu0 0.0
        %1134 = vmatpush1.xpose.msra.mxu0 0.0
        %1135 = vmatprep.subr.mxu0 0.0
        %1136 = vmatpush1.xpose.msra.mxu0 0.0
        %1137 = vmatprep.subr.mxu0 0.0
        %1138 = vmatpush1.xpose.msra.mxu0 0.0
        %1139 = vmatprep.subr.mxu0 0.0
        %1140 = vmatpush1.xpose.msra.mxu0 0.0
        %1141 = vmatprep.subr.mxu0 0.0
        %1142 = vmatpush1.xpose.msra.mxu0 0.0
        %1143 = vmatprep.subr.mxu0 0.0
        %1144 = vmatpush1.xpose.msra.mxu0 0.0
        %1145 = vmatprep.subr.mxu0 0.0
        %1146 = vmatpush1.xpose.msra.mxu0 0.0
        %1147 = vmatprep.subr.mxu0 0.0
        %1148 = vmatpush1.xpose.msra.mxu0 0.0
        %1149 = vmatprep.subr.mxu0 0.0
        %1150 = vmatpush1.xpose.msra.mxu0 0.0
        %1151 = vmatprep.subr.mxu0 0.0
        %1152 = vmatpush1.xpose.msra.mxu0 0.0
        %1153 = vmatprep.subr.mxu0 0.0
        %1154 = vmatpush1.xpose.msra.mxu0 0.0
        %1155 = vmatprep.subr.mxu0 0.0
        %1156 = vmatpush1.xpose.msra.mxu0 0.0
        %1157 = vmatprep.subr.mxu0 0.0
        %1158 = vmatpush1.xpose.msra.mxu0 %v1125
        %1159 = vmatprep.subr.mxu0 0.0
        %1160 = vmatpush2.xpose.msra.mxu0 0.0
        %1161 = vmatprep.subr.mxu0 0.0
        %1162 = vmatpush2.xpose.msra.mxu0 0.0
        %1163 = vmatprep.subr.mxu0 0.0
        %1164 = vmatpush2.xpose.msra.mxu0 0.0
        %1165 = vmatprep.subr.mxu0 0.0
        %1166 = vmatpush2.xpose.msra.mxu0 0.0
        %1167 = vmatprep.subr.mxu0 0.0
        %1168 = vmatpush2.xpose.msra.mxu0 0.0
        %1169 = vmatprep.subr.mxu0 0.0
        %1170 = vmatpush2.xpose.msra.mxu0 0.0
        %1171 = vmatprep.subr.mxu0 0.0
        %1172 = vmatpush2.xpose.msra.mxu0 0.0
        %1173 = vmatprep.subr.mxu0 0.0
        %1174 = vmatpush2.xpose.msra.mxu0 0.0
        %1175 = vmatprep.subr.mxu0 0.0
        %1176 = vmatpush2.xpose.msra.mxu0 0.0
        %1177 = vmatprep.subr.mxu0 0.0
        %1178 = vmatpush2.xpose.msra.mxu0 0.0
        %1179 = vmatprep.subr.mxu0 0.0
        %1180 = vmatpush2.xpose.msra.mxu0 0.0
        %1181 = vmatprep.subr.mxu0 0.0
        %1182 = vmatpush2.xpose.msra.mxu0 0.0
        %1183 = vmatprep.subr.mxu0 0.0
        %1184 = vmatpush2.xpose.msra.mxu0 0.0
        %1185 = vmatprep.subr.mxu0 0.0
        %1186 = vmatpush2.xpose.msra.mxu0 0.0
        %1187 = vmatprep.subr.mxu0 0.0
        %1188 = vmatpush2.xpose.msra.mxu0 0.0
        %1189 = vmatprep.subr.mxu0 0.0
        %1190 = vmatpush2.xpose.msra.mxu0 0.0
        %1191 = vmatprep.mubr.f32.mxu0 0.0
        %1192 = vmatmul.mubr.f32.gmra.mxu0 %v1122
        %v1193 = vpop.f32.mrf.mxu0
        %v1194 = vadd.f32 0.0, %v1193
        %v1195 = vpop.f32.mrf.mxu0
        %1196 = vdwg.mxu0
        %v1198 = vsel %vm968, %v664, 0
        %v1201 = vsel %vm968, %v819, 0
        %1203 = vmatprep.subr.mxu0 0.0
        %1204 = vmatpush1.xpose.msra.mxu0 0.0
        %1205 = vmatprep.subr.mxu0 0.0
        %1206 = vmatpush1.xpose.msra.mxu0 0.0
        %1207 = vmatprep.subr.mxu0 0.0
        %1208 = vmatpush1.xpose.msra.mxu0 0.0
        %1209 = vmatprep.subr.mxu0 0.0
        %1210 = vmatpush1.xpose.msra.mxu0 0.0
        %1211 = vmatprep.subr.mxu0 0.0
        %1212 = vmatpush1.xpose.msra.mxu0 0.0
        %1213 = vmatprep.subr.mxu0 0.0
        %1214 = vmatpush1.xpose.msra.mxu0 0.0
        %1215 = vmatprep.subr.mxu0 0.0
        %1216 = vmatpush1.xpose.msra.mxu0 0.0
        %1217 = vmatprep.subr.mxu0 0.0
        %1218 = vmatpush1.xpose.msra.mxu0 0.0
        %1219 = vmatprep.subr.mxu0 0.0
        %1220 = vmatpush1.xpose.msra.mxu0 0.0
        %1221 = vmatprep.subr.mxu0 0.0
        %1222 = vmatpush1.xpose.msra.mxu0 0.0
        %1223 = vmatprep.subr.mxu0 0.0
        %1224 = vmatpush1.xpose.msra.mxu0 0.0
        %1225 = vmatprep.subr.mxu0 0.0
        %1226 = vmatpush1.xpose.msra.mxu0 0.0
        %1227 = vmatprep.subr.mxu0 0.0
        %1228 = vmatpush1.xpose.msra.mxu0 0.0
        %1229 = vmatprep.subr.mxu0 0.0
        %1230 = vmatpush1.xpose.msra.mxu0 0.0
        %1231 = vmatprep.subr.mxu0 0.0
        %1232 = vmatpush1.xpose.msra.mxu0 0.0
        %1233 = vmatprep.subr.mxu0 0.0
        %1234 = vmatpush1.xpose.msra.mxu0 %v1201
        %1235 = vmatprep.subr.mxu0 0.0
        %1236 = vmatpush2.xpose.msra.mxu0 0.0
        %1237 = vmatprep.subr.mxu0 0.0
        %1238 = vmatpush2.xpose.msra.mxu0 0.0
        %1239 = vmatprep.subr.mxu0 0.0
        %1240 = vmatpush2.xpose.msra.mxu0 0.0
        %1241 = vmatprep.subr.mxu0 0.0
        %1242 = vmatpush2.xpose.msra.mxu0 0.0
        %1243 = vmatprep.subr.mxu0 0.0
        %1244 = vmatpush2.xpose.msra.mxu0 0.0
        %1245 = vmatprep.subr.mxu0 0.0
        %1246 = vmatpush2.xpose.msra.mxu0 0.0
        %1247 = vmatprep.subr.mxu0 0.0
        %1248 = vmatpush2.xpose.msra.mxu0 0.0
        %1249 = vmatprep.subr.mxu0 0.0
        %1250 = vmatpush2.xpose.msra.mxu0 0.0
        %1251 = vmatprep.subr.mxu0 0.0
        %1252 = vmatpush2.xpose.msra.mxu0 0.0
        %1253 = vmatprep.subr.mxu0 0.0
        %1254 = vmatpush2.xpose.msra.mxu0 0.0
        %1255 = vmatprep.subr.mxu0 0.0
        %1256 = vmatpush2.xpose.msra.mxu0 0.0
        %1257 = vmatprep.subr.mxu0 0.0
        %1258 = vmatpush2.xpose.msra.mxu0 0.0
        %1259 = vmatprep.subr.mxu0 0.0
        %1260 = vmatpush2.xpose.msra.mxu0 0.0
        %1261 = vmatprep.subr.mxu0 0.0
        %1262 = vmatpush2.xpose.msra.mxu0 0.0
        %1263 = vmatprep.subr.mxu0 0.0
        %1264 = vmatpush2.xpose.msra.mxu0 0.0
        %1265 = vmatprep.subr.mxu0 0.0
        %1266 = vmatpush2.xpose.msra.mxu0 0.0
        %1267 = vmatprep.mubr.f32.mxu0 0.0
        %1268 = vmatmul.mubr.f32.gmra.mxu0 %v1198
        %v1269 = vpop.f32.mrf.mxu0
        %v1270 = vadd.f32 0.0, %v1269
        %v1271 = vpop.f32.mrf.mxu0
        %1272 = vdwg.mxu0
        %v1273 = vlaneseq
        %v1274 = vshrl.u32 %v1273, 7
        %v1275 = vlaneseq
        %v1276 = vand.u32 %v1275, 127
        %vm1277 = vcmp.gt.s32.totalorder %v1276, %v1274
        %v1278 = vsel %vm1277, 1, 0
        %vm1279 = vcmp.eq.s32.totalorder %v1278, 1
        %v1280 = vsel %vm1279, -1e+30, %v1042
        %v1281 = vsel %vm1279, -1e+30, %v1118
        %v1282 = vsel %vm1279, -1e+30, %v1194
        %v1283 = vsel %vm1279, -1e+30, %v1270
        %v1284 = vsel %vm968, %v1280, -inf
        %1285 = vmax.xlane.f32.xlu0 %v1284
        %v1286 = vpop.xlane.xlu0 %1285
        %v1287 = vsel %vm968, %v1281, -inf
        %1288 = vmax.xlane.f32.xlu0 %v1287
        %v1289 = vpop.xlane.xlu0 %1288
        %v1290 = vsel %vm968, %v1282, -inf
        %1291 = vmax.xlane.f32.xlu0 %v1290
        %v1292 = vpop.xlane.xlu0 %1291
        %v1293 = vsel %vm968, %v1283, -inf
        %1294 = vmax.xlane.f32.xlu0 %v1293
        %v1295 = vpop.xlane.xlu0 %1294
        %v1296 = vsub.f32 %v1280, %v1286
        %v1297 = vsub.f32 %v1281, %v1289
        %v1298 = vsub.f32 %v1282, %v1292
        %v1299 = vsub.f32 %v1283, %v1295
        %v1300 = vmul.f32 %v1296, 1.442695
        %v1301 = vpow.pop %v1300
        %v1302 = vmul.f32 %v1297, 1.442695
        %v1303 = vpow.pop %v1302
        %v1304 = vmul.f32 %v1298, 1.442695
        %v1305 = vpow.pop %v1304
        %v1306 = vmul.f32 %v1299, 1.442695
        %v1307 = vpow.pop %v1306
        %v1308 = vsel %vm968, %v1301, 0.0
        %1309 = vadd.xlane.f32.xlu0 %v1308
        %v1310 = vpop.xlane.xlu0 %1309
        %v1311 = vsel %vm968, %v1303, 0.0
        %1312 = vadd.xlane.f32.xlu0 %v1311
        %v1313 = vpop.xlane.xlu0 %1312
        %v1314 = vsel %vm968, %v1305, 0.0
        %1315 = vadd.xlane.f32.xlu0 %v1314
        %v1316 = vpop.xlane.xlu0 %1315
        %v1317 = vsel %vm968, %v1307, 0.0
        %1318 = vadd.xlane.f32.xlu0 %v1317
        %v1319 = vpop.xlane.xlu0 %1318
        %v1320 = vrcp.pop %v1310
        %v1321 = vrcp.pop %v1313
        %v1322 = vrcp.pop %v1316
        %v1323 = vrcp.pop %v1319
        %v1324 = vmul.f32 %v1301, %v1320
        %v1325 = vmul.f32 %v1303, %v1321
        %v1326 = vmul.f32 %v1305, %v1322
        %v1327 = vmul.f32 %v1307, %v1323
        %v1329 = vsel %vm968, %v1324, 0
        %1331 = vmatprep.subr.mxu0 0.0
        %1332 = vmatpush1.msra.mxu0 0.0
        %1333 = vmatprep.subr.mxu0 0.0
        %1334 = vmatpush1.msra.mxu0 0.0
        %1335 = vmatprep.subr.mxu0 0.0
        %1336 = vmatpush1.msra.mxu0 0.0
        %1337 = vmatprep.subr.mxu0 0.0
        %1338 = vmatpush1.msra.mxu0 0.0
        %1339 = vmatprep.subr.mxu0 0.0
        %1340 = vmatpush1.msra.mxu0 0.0
        %1341 = vmatprep.subr.mxu0 0.0
        %1342 = vmatpush1.msra.mxu0 0.0
        %1343 = vmatprep.subr.mxu0 0.0
        %1344 = vmatpush1.msra.mxu0 0.0
        %1345 = vmatprep.subr.mxu0 0.0
        %1346 = vmatpush1.msra.mxu0 0.0
        %1347 = vmatprep.subr.mxu0 0.0
        %1348 = vmatpush1.msra.mxu0 0.0
        %1349 = vmatprep.subr.mxu0 0.0
        %1350 = vmatpush1.msra.mxu0 0.0
        %1351 = vmatprep.subr.mxu0 0.0
        %1352 = vmatpush1.msra.mxu0 0.0
        %1353 = vmatprep.subr.mxu0 0.0
        %1354 = vmatpush1.msra.mxu0 0.0
        %1355 = vmatprep.subr.mxu0 0.0
        %1356 = vmatpush1.msra.mxu0 0.0
        %1357 = vmatprep.subr.mxu0 0.0
        %1358 = vmatpush1.msra.mxu0 0.0
        %1359 = vmatprep.subr.mxu0 0.0
        %1360 = vmatpush1.msra.mxu0 0.0
        %1361 = vmatprep.subr.mxu0 0.0
        %1362 = vmatpush1.msra.mxu0 %v964
        %1363 = vmatprep.subr.mxu0 0.0
        %1364 = vmatpush2.msra.mxu0 0.0
        %1365 = vmatprep.subr.mxu0 0.0
        %1366 = vmatpush2.msra.mxu0 0.0
        %1367 = vmatprep.subr.mxu0 0.0
        %1368 = vmatpush2.msra.mxu0 0.0
        %1369 = vmatprep.subr.mxu0 0.0
        %1370 = vmatpush2.msra.mxu0 0.0
        %1371 = vmatprep.subr.mxu0 0.0
        %1372 = vmatpush2.msra.mxu0 0.0
        %1373 = vmatprep.subr.mxu0 0.0
        %1374 = vmatpush2.msra.mxu0 0.0
        %1375 = vmatprep.subr.mxu0 0.0
        %1376 = vmatpush2.msra.mxu0 0.0
        %1377 = vmatprep.subr.mxu0 0.0
        %1378 = vmatpush2.msra.mxu0 0.0
        %1379 = vmatprep.subr.mxu0 0.0
        %1380 = vmatpush2.msra.mxu0 0.0
        %1381 = vmatprep.subr.mxu0 0.0
        %1382 = vmatpush2.msra.mxu0 0.0
        %1383 = vmatprep.subr.mxu0 0.0
        %1384 = vmatpush2.msra.mxu0 0.0
        %1385 = vmatprep.subr.mxu0 0.0
        %1386 = vmatpush2.msra.mxu0 0.0
        %1387 = vmatprep.subr.mxu0 0.0
        %1388 = vmatpush2.msra.mxu0 0.0
        %1389 = vmatprep.subr.mxu0 0.0
        %1390 = vmatpush2.msra.mxu0 0.0
        %1391 = vmatprep.subr.mxu0 0.0
        %1392 = vmatpush2.msra.mxu0 0.0
        %1393 = vmatprep.subr.mxu0 0.0
        %1394 = vmatpush2.msra.mxu0 0.0
        %1395 = vmatprep.mubr.f32.mxu0 0.0
        %1396 = vmatmul.mubr.f32.gmra.mxu0 %v1329
        %v1397 = vpop.f32.mrf.mxu0
        %v1398 = vadd.f32 0.0, %v1397
        %v1399 = vpop.f32.mrf.mxu0
        %1400 = vdwg.mxu0
        %v1402 = vsel %vm968, %v1325, 0
        %1404 = vmatprep.subr.mxu0 0.0
        %1405 = vmatpush1.msra.mxu0 0.0
        %1406 = vmatprep.subr.mxu0 0.0
        %1407 = vmatpush1.msra.mxu0 0.0
        %1408 = vmatprep.subr.mxu0 0.0
        %1409 = vmatpush1.msra.mxu0 0.0
        %1410 = vmatprep.subr.mxu0 0.0
        %1411 = vmatpush1.msra.mxu0 0.0
        %1412 = vmatprep.subr.mxu0 0.0
        %1413 = vmatpush1.msra.mxu0 0.0
        %1414 = vmatprep.subr.mxu0 0.0
        %1415 = vmatpush1.msra.mxu0 0.0
        %1416 = vmatprep.subr.mxu0 0.0
        %1417 = vmatpush1.msra.mxu0 0.0
        %1418 = vmatprep.subr.mxu0 0.0
        %1419 = vmatpush1.msra.mxu0 0.0
        %1420 = vmatprep.subr.mxu0 0.0
        %1421 = vmatpush1.msra.mxu0 0.0
        %1422 = vmatprep.subr.mxu0 0.0
        %1423 = vmatpush1.msra.mxu0 0.0
        %1424 = vmatprep.subr.mxu0 0.0
        %1425 = vmatpush1.msra.mxu0 0.0
        %1426 = vmatprep.subr.mxu0 0.0
        %1427 = vmatpush1.msra.mxu0 0.0
        %1428 = vmatprep.subr.mxu0 0.0
        %1429 = vmatpush1.msra.mxu0 0.0
        %1430 = vmatprep.subr.mxu0 0.0
        %1431 = vmatpush1.msra.mxu0 0.0
        %1432 = vmatprep.subr.mxu0 0.0
        %1433 = vmatpush1.msra.mxu0 0.0
        %1434 = vmatprep.subr.mxu0 0.0
        %1435 = vmatpush1.msra.mxu0 %v965
        %1436 = vmatprep.subr.mxu0 0.0
        %1437 = vmatpush2.msra.mxu0 0.0
        %1438 = vmatprep.subr.mxu0 0.0
        %1439 = vmatpush2.msra.mxu0 0.0
        %1440 = vmatprep.subr.mxu0 0.0
        %1441 = vmatpush2.msra.mxu0 0.0
        %1442 = vmatprep.subr.mxu0 0.0
        %1443 = vmatpush2.msra.mxu0 0.0
        %1444 = vmatprep.subr.mxu0 0.0
        %1445 = vmatpush2.msra.mxu0 0.0
        %1446 = vmatprep.subr.mxu0 0.0
        %1447 = vmatpush2.msra.mxu0 0.0
        %1448 = vmatprep.subr.mxu0 0.0
        %1449 = vmatpush2.msra.mxu0 0.0
        %1450 = vmatprep.subr.mxu0 0.0
        %1451 = vmatpush2.msra.mxu0 0.0
        %1452 = vmatprep.subr.mxu0 0.0
        %1453 = vmatpush2.msra.mxu0 0.0
        %1454 = vmatprep.subr.mxu0 0.0
        %1455 = vmatpush2.msra.mxu0 0.0
        %1456 = vmatprep.subr.mxu0 0.0
        %1457 = vmatpush2.msra.mxu0 0.0
        %1458 = vmatprep.subr.mxu0 0.0
        %1459 = vmatpush2.msra.mxu0 0.0
        %1460 = vmatprep.subr.mxu0 0.0
        %1461 = vmatpush2.msra.mxu0 0.0
        %1462 = vmatprep.subr.mxu0 0.0
        %1463 = vmatpush2.msra.mxu0 0.0
        %1464 = vmatprep.subr.mxu0 0.0
        %1465 = vmatpush2.msra.mxu0 0.0
        %1466 = vmatprep.subr.mxu0 0.0
        %1467 = vmatpush2.msra.mxu0 0.0
        %1468 = vmatprep.mubr.f32.mxu0 0.0
        %1469 = vmatmul.mubr.f32.gmra.mxu0 %v1402
        %v1470 = vpop.f32.mrf.mxu0
        %v1471 = vadd.f32 0.0, %v1470
        %v1472 = vpop.f32.mrf.mxu0
        %1473 = vdwg.mxu0
        %v1475 = vsel %vm968, %v1326, 0
        %1477 = vmatprep.subr.mxu0 0.0
        %1478 = vmatpush1.msra.mxu0 0.0
        %1479 = vmatprep.subr.mxu0 0.0
        %1480 = vmatpush1.msra.mxu0 0.0
        %1481 = vmatprep.subr.mxu0 0.0
        %1482 = vmatpush1.msra.mxu0 0.0
        %1483 = vmatprep.subr.mxu0 0.0
        %1484 = vmatpush1.msra.mxu0 0.0
        %1485 = vmatprep.subr.mxu0 0.0
        %1486 = vmatpush1.msra.mxu0 0.0
        %1487 = vmatprep.subr.mxu0 0.0
        %1488 = vmatpush1.msra.mxu0 0.0
        %1489 = vmatprep.subr.mxu0 0.0
        %1490 = vmatpush1.msra.mxu0 0.0
        %1491 = vmatprep.subr.mxu0 0.0
        %1492 = vmatpush1.msra.mxu0 0.0
        %1493 = vmatprep.subr.mxu0 0.0
        %1494 = vmatpush1.msra.mxu0 0.0
        %1495 = vmatprep.subr.mxu0 0.0
        %1496 = vmatpush1.msra.mxu0 0.0
        %1497 = vmatprep.subr.mxu0 0.0
        %1498 = vmatpush1.msra.mxu0 0.0
        %1499 = vmatprep.subr.mxu0 0.0
        %1500 = vmatpush1.msra.mxu0 0.0
        %1501 = vmatprep.subr.mxu0 0.0
        %1502 = vmatpush1.msra.mxu0 0.0
        %1503 = vmatprep.subr.mxu0 0.0
        %1504 = vmatpush1.msra.mxu0 0.0
        %1505 = vmatprep.subr.mxu0 0.0
        %1506 = vmatpush1.msra.mxu0 0.0
        %1507 = vmatprep.subr.mxu0 0.0
        %1508 = vmatpush1.msra.mxu0 %v966
        %1509 = vmatprep.subr.mxu0 0.0
        %1510 = vmatpush2.msra.mxu0 0.0
        %1511 = vmatprep.subr.mxu0 0.0
        %1512 = vmatpush2.msra.mxu0 0.0
        %1513 = vmatprep.subr.mxu0 0.0
        %1514 = vmatpush2.msra.mxu0 0.0
        %1515 = vmatprep.subr.mxu0 0.0
        %1516 = vmatpush2.msra.mxu0 0.0
        %1517 = vmatprep.subr.mxu0 0.0
        %1518 = vmatpush2.msra.mxu0 0.0
        %1519 = vmatprep.subr.mxu0 0.0
        %1520 = vmatpush2.msra.mxu0 0.0
        %1521 = vmatprep.subr.mxu0 0.0
        %1522 = vmatpush2.msra.mxu0 0.0
        %1523 = vmatprep.subr.mxu0 0.0
        %1524 = vmatpush2.msra.mxu0 0.0
        %1525 = vmatprep.subr.mxu0 0.0
        %1526 = vmatpush2.msra.mxu0 0.0
        %1527 = vmatprep.subr.mxu0 0.0
        %1528 = vmatpush2.msra.mxu0 0.0
        %1529 = vmatprep.subr.mxu0 0.0
        %1530 = vmatpush2.msra.mxu0 0.0
        %1531 = vmatprep.subr.mxu0 0.0
        %1532 = vmatpush2.msra.mxu0 0.0
        %1533 = vmatprep.subr.mxu0 0.0
        %1534 = vmatpush2.msra.mxu0 0.0
        %1535 = vmatprep.subr.mxu0 0.0
        %1536 = vmatpush2.msra.mxu0 0.0
        %1537 = vmatprep.subr.mxu0 0.0
        %1538 = vmatpush2.msra.mxu0 0.0
        %1539 = vmatprep.subr.mxu0 0.0
        %1540 = vmatpush2.msra.mxu0 0.0
        %1541 = vmatprep.mubr.f32.mxu0 0.0
        %1542 = vmatmul.mubr.f32.gmra.mxu0 %v1475
        %v1543 = vpop.f32.mrf.mxu0
        %v1544 = vadd.f32 0.0, %v1543
        %v1545 = vpop.f32.mrf.mxu0
        %1546 = vdwg.mxu0
        %v1548 = vsel %vm968, %v1327, 0
        %1550 = vmatprep.subr.mxu0 0.0
        %1551 = vmatpush1.msra.mxu0 0.0
        %1552 = vmatprep.subr.mxu0 0.0
        %1553 = vmatpush1.msra.mxu0 0.0
        %1554 = vmatprep.subr.mxu0 0.0
        %1555 = vmatpush1.msra.mxu0 0.0
        %1556 = vmatprep.subr.mxu0 0.0
        %1557 = vmatpush1.msra.mxu0 0.0
        %1558 = vmatprep.subr.mxu0 0.0
        %1559 = vmatpush1.msra.mxu0 0.0
        %1560 = vmatprep.subr.mxu0 0.0
        %1561 = vmatpush1.msra.mxu0 0.0
        %1562 = vmatprep.subr.mxu0 0.0
        %1563 = vmatpush1.msra.mxu0 0.0
        %1564 = vmatprep.subr.mxu0 0.0
        %1565 = vmatpush1.msra.mxu0 0.0
        %1566 = vmatprep.subr.mxu0 0.0
        %1567 = vmatpush1.msra.mxu0 0.0
        %1568 = vmatprep.subr.mxu0 0.0
        %1569 = vmatpush1.msra.mxu0 0.0
        %1570 = vmatprep.subr.mxu0 0.0
        %1571 = vmatpush1.msra.mxu0 0.0
        %1572 = vmatprep.subr.mxu0 0.0
        %1573 = vmatpush1.msra.mxu0 0.0
        %1574 = vmatprep.subr.mxu0 0.0
        %1575 = vmatpush1.msra.mxu0 0.0
        %1576 = vmatprep.subr.mxu0 0.0
        %1577 = vmatpush1.msra.mxu0 0.0
        %1578 = vmatprep.subr.mxu0 0.0
        %1579 = vmatpush1.msra.mxu0 0.0
        %1580 = vmatprep.subr.mxu0 0.0
        %1581 = vmatpush1.msra.mxu0 %v967
        %1582 = vmatprep.subr.mxu0 0.0
        %1583 = vmatpush2.msra.mxu0 0.0
        %1584 = vmatprep.subr.mxu0 0.0
        %1585 = vmatpush2.msra.mxu0 0.0
        %1586 = vmatprep.subr.mxu0 0.0
        %1587 = vmatpush2.msra.mxu0 0.0
        %1588 = vmatprep.subr.mxu0 0.0
        %1589 = vmatpush2.msra.mxu0 0.0
        %1590 = vmatprep.subr.mxu0 0.0
        %1591 = vmatpush2.msra.mxu0 0.0
        %1592 = vmatprep.subr.mxu0 0.0
        %1593 = vmatpush2.msra.mxu0 0.0
        %1594 = vmatprep.subr.mxu0 0.0
        %1595 = vmatpush2.msra.mxu0 0.0
        %1596 = vmatprep.subr.mxu0 0.0
        %1597 = vmatpush2.msra.mxu0 0.0
        %1598 = vmatprep.subr.mxu0 0.0
        %1599 = vmatpush2.msra.mxu0 0.0
        %1600 = vmatprep.subr.mxu0 0.0
        %1601 = vmatpush2.msra.mxu0 0.0
        %1602 = vmatprep.subr.mxu0 0.0
        %1603 = vmatpush2.msra.mxu0 0.0
        %1604 = vmatprep.subr.mxu0 0.0
        %1605 = vmatpush2.msra.mxu0 0.0
        %1606 = vmatprep.subr.mxu0 0.0
        %1607 = vmatpush2.msra.mxu0 0.0
        %1608 = vmatprep.subr.mxu0 0.0
        %1609 = vmatpush2.msra.mxu0 0.0
        %1610 = vmatprep.subr.mxu0 0.0
        %1611 = vmatpush2.msra.mxu0 0.0
        %1612 = vmatprep.subr.mxu0 0.0
        %1613 = vmatpush2.msra.mxu0 0.0
        %1614 = vmatprep.mubr.f32.mxu0 0.0
        %1615 = vmatmul.mubr.f32.gmra.mxu0 %v1548
        %v1616 = vpop.f32.mrf.mxu0
        %v1617 = vadd.f32 0.0, %v1616
        %v1618 = vpop.f32.mrf.mxu0
        %1619 = vdwg.mxu0
        %v1620 = vcombine.low %v1398, %v1544
        %v1621 = vcombine.high %v1398, %v1544
        %v1623 = vunpack.c.l.s4 1983009808
        %v1624 = vunpack.c.0.s8 %v1623
        %v1625 = vlaneseq
        %v1626 = vshrl.u32 %v1625, 7
        %v1627 = vsub.s32 %v1624, %v1626
        %v1628 = vrot.slane %v1620, %v1627
        %v1630 = vunpack.c.l.s4 1983009808
        %v1631 = vunpack.c.0.s8 %v1630
        %v1632 = vlaneseq
        %v1633 = vshrl.u32 %v1632, 7
        %v1634 = vsub.s32 %v1631, %v1633
        %v1635 = vrot.slane %v1621, %v1634
        %v1636 = vcombine.low %v1471, %v1617
        %v1637 = vcombine.high %v1471, %v1617
        %v1639 = vunpack.c.l.s4 1983009808
        %v1640 = vunpack.c.0.s8 %v1639
        %v1641 = vlaneseq
        %v1642 = vshrl.u32 %v1641, 7
        %v1643 = vsub.s32 %v1640, %v1642
        %v1644 = vrot.slane %v1636, %v1643
        %v1646 = vunpack.c.l.s4 1983009808
        %v1647 = vunpack.c.0.s8 %v1646
        %v1648 = vlaneseq
        %v1649 = vshrl.u32 %v1648, 7
        %v1650 = vsub.s32 %v1647, %v1649
        %v1651 = vrot.slane %v1637, %v1650
        %v1652 = vcombine.low %v1628, %v1644
        %v1653 = vcombine.high %v1628, %v1644
        %v1655 = vunpack.c.l.s4 1934713408
        %v1656 = vunpack.c.0.s8 %v1655
        %v1657 = vlaneseq
        %v1658 = vshrl.u32 %v1657, 7
        %v1659 = vsub.s32 %v1656, %v1658
        %v1660 = vrot.slane %v1652, %v1659
        %v1662 = vunpack.c.l.s4 1934713408
        %v1663 = vunpack.c.0.s8 %v1662
        %v1664 = vlaneseq
        %v1665 = vshrl.u32 %v1664, 7
        %v1666 = vsub.s32 %v1663, %v1665
        %v1667 = vrot.slane %v1653, %v1666
        %v1668 = vcombine.low %v1635, %v1651
        %v1669 = vcombine.high %v1635, %v1651
        %v1671 = vunpack.c.l.s4 1934713408
        %v1672 = vunpack.c.0.s8 %v1671
        %v1673 = vlaneseq
        %v1674 = vshrl.u32 %v1673, 7
        %v1675 = vsub.s32 %v1672, %v1674
        %v1676 = vrot.slane %v1668, %v1675
        %v1678 = vunpack.c.l.s4 1934713408
        %v1679 = vunpack.c.0.s8 %v1678
        %v1680 = vlaneseq
        %v1681 = vshrl.u32 %v1680, 7
        %v1682 = vsub.s32 %v1679, %v1681
        %v1683 = vrot.slane %v1669, %v1682
        %v1684 = vcombine.high %v1660, 0.0
        %v1685 = vcombine.high %v1667, 0.0
        %v1686 = vcombine.high %v1676, 0.0
        %v1687 = vcombine.high %v1683, 0.0
        %v1688 = vcombine.low %v1660, %v1667
        %v1690 = vunpack.c.l.s4 1983009808
        %v1691 = vunpack.c.0.s8 %v1690
        %v1692 = vlaneseq
        %v1693 = vshrl.u32 %v1692, 7
        %v1694 = vsub.s32 %v1691, %v1693
        %v1695 = vrot.slane %v1688, %v1694
        %v1696 = vcombine.low %v1684, %v1685
        %v1698 = vunpack.c.l.s4 1983009808
        %v1699 = vunpack.c.0.s8 %v1698
        %v1700 = vlaneseq
        %v1701 = vshrl.u32 %v1700, 7
        %v1702 = vsub.s32 %v1699, %v1701
        %v1703 = vrot.slane %v1696, %v1702
        %v1704 = vcombine.low %v1676, %v1683
        %v1706 = vunpack.c.l.s4 1983009808
        %v1707 = vunpack.c.0.s8 %v1706
        %v1708 = vlaneseq
        %v1709 = vshrl.u32 %v1708, 7
        %v1710 = vsub.s32 %v1707, %v1709
        %v1711 = vrot.slane %v1704, %v1710
        %v1712 = vcombine.low %v1686, %v1687
        %v1714 = vunpack.c.l.s4 1983009808
        %v1715 = vunpack.c.0.s8 %v1714
        %v1716 = vlaneseq
        %v1717 = vshrl.u32 %v1716, 7
        %v1718 = vsub.s32 %v1715, %v1717
        %v1719 = vrot.slane %v1712, %v1718
        %v1720 = vcombine.low %v1695, %v1703
        %v1721 = vcombine.high %v1695, %v1703
        %v1723 = vunpack.c.l.s4 1934713408
        %v1724 = vunpack.c.0.s8 %v1723
        %v1725 = vlaneseq
        %v1726 = vshrl.u32 %v1725, 7
        %v1727 = vsub.s32 %v1724, %v1726
        %v1728 = vrot.slane %v1720, %v1727
        %v1730 = vunpack.c.l.s4 1934713408
        %v1731 = vunpack.c.0.s8 %v1730
        %v1732 = vlaneseq
        %v1733 = vshrl.u32 %v1732, 7
        %v1734 = vsub.s32 %v1731, %v1733
        %v1735 = vrot.slane %v1721, %v1734
        %v1736 = vcombine.low %v1711, %v1719
        %v1737 = vcombine.high %v1711, %v1719
        %v1739 = vunpack.c.l.s4 1934713408
        %v1740 = vunpack.c.0.s8 %v1739
        %v1741 = vlaneseq
        %v1742 = vshrl.u32 %v1741, 7
        %v1743 = vsub.s32 %v1740, %v1742
        %v1744 = vrot.slane %v1736, %v1743
        %v1746 = vunpack.c.l.s4 1934713408
        %v1747 = vunpack.c.0.s8 %v1746
        %v1748 = vlaneseq
        %v1749 = vshrl.u32 %v1748, 7
        %v1750 = vsub.s32 %v1747, %v1749
        %v1751 = vrot.slane %v1737, %v1750
        %v1752 = vcombine.low %v1728, %v1744
        %v1753 = vcombine.high %v1728, %v1744
        %v1754 = vcombine.low %v1735, %v1751
        %v1755 = vcombine.high %v1735, %v1751
        %1757 = vrot.lane.b32.xlu0 %v1753, 8
        %v1758 = vpop.permute.xlu0 %1757
        %1761 = vrot.lane.b32.xlu0 %v1754, 16
        %v1762 = vpop.permute.xlu0 %1761
        %1765 = vrot.lane.b32.xlu0 %v1755, 24
        %v1766 = vpop.permute.xlu0 %1765
        %v1768 = vsel %vm968, %v1752, %v1758
        %vm1769 = vcmask 130048
        %v1770 = vsel %vm1769, %v1768, %v1762
        %vm1771 = vcmask 195584
        %v1772 = vsel %vm1771, %v1770, %v1766
        %1773 = vst.msk [vmem:[#allocation2] sm:$0xff] %vm412, %v1772
        %v1774 = vld [vmem:[#allocation2] sm:$0xff]
        %v1775 = vld [vmem:[%s2] sm:$0xff]
        %v1776 = vld [vmem:[%s2 + $0x8] sm:$0xff]
        %v1777 = vld [vmem:[%s2 + $0x10] sm:$0xff]
        %v1778 = vld [vmem:[%s2 + $0x18] sm:$0xff]
        %v1779 = vld [vmem:[%s3] sm:$0x1]
        %v1781 = vlaneseq
        %v1782 = vshrl.u32 %v1781, 7
        %v1783 = vsub.s32 0, %v1782
        %v1784 = vrot.slane %v1779, %v1783
        %v1787 = vsel %vm412, %v1774, 0
        %1789 = vmatprep.subr.mxu0 0.0
        %1790 = vmatpush1.msra.mxu0 0.0
        %1791 = vmatprep.subr.mxu0 0.0
        %1792 = vmatpush1.msra.mxu0 0.0
        %1793 = vmatprep.subr.mxu0 0.0
        %1794 = vmatpush1.msra.mxu0 0.0
        %1795 = vmatprep.subr.mxu0 0.0
        %1796 = vmatpush1.msra.mxu0 0.0
        %1797 = vmatprep.subr.mxu0 0.0
        %1798 = vmatpush1.msra.mxu0 0.0
        %1799 = vmatprep.subr.mxu0 0.0
        %1800 = vmatpush1.msra.mxu0 0.0
        %1801 = vmatprep.subr.mxu0 0.0
        %1802 = vmatpush1.msra.mxu0 0.0
        %1803 = vmatprep.subr.mxu0 0.0
        %1804 = vmatpush1.msra.mxu0 0.0
        %1805 = vmatprep.subr.mxu0 0.0
        %1806 = vmatpush1.msra.mxu0 0.0
        %1807 = vmatprep.subr.mxu0 0.0
        %1808 = vmatpush1.msra.mxu0 0.0
        %1809 = vmatprep.subr.mxu0 0.0
        %1810 = vmatpush1.msra.mxu0 0.0
        %1811 = vmatprep.subr.mxu0 0.0
        %1812 = vmatpush1.msra.mxu0 0.0
        %1813 = vmatprep.subr.mxu0 0.0
        %1814 = vmatpush1.msra.mxu0 %v1778
        %1815 = vmatprep.subr.mxu0 0.0
        %1816 = vmatpush1.msra.mxu0 %v1777
        %1817 = vmatprep.subr.mxu0 0.0
        %1818 = vmatpush1.msra.mxu0 %v1776
        %1819 = vmatprep.subr.mxu0 0.0
        %1820 = vmatpush1.msra.mxu0 %v1775
        %1821 = vmatprep.subr.mxu0 0.0
        %1822 = vmatpush2.msra.mxu0 0.0
        %1823 = vmatprep.subr.mxu0 0.0
        %1824 = vmatpush2.msra.mxu0 0.0
        %1825 = vmatprep.subr.mxu0 0.0
        %1826 = vmatpush2.msra.mxu0 0.0
        %1827 = vmatprep.subr.mxu0 0.0
        %1828 = vmatpush2.msra.mxu0 0.0
        %1829 = vmatprep.subr.mxu0 0.0
        %1830 = vmatpush2.msra.mxu0 0.0
        %1831 = vmatprep.subr.mxu0 0.0
        %1832 = vmatpush2.msra.mxu0 0.0
        %1833 = vmatprep.subr.mxu0 0.0
        %1834 = vmatpush2.msra.mxu0 0.0
        %1835 = vmatprep.subr.mxu0 0.0
        %1836 = vmatpush2.msra.mxu0 0.0
        %1837 = vmatprep.subr.mxu0 0.0
        %1838 = vmatpush2.msra.mxu0 0.0
        %1839 = vmatprep.subr.mxu0 0.0
        %1840 = vmatpush2.msra.mxu0 0.0
        %1841 = vmatprep.subr.mxu0 0.0
        %1842 = vmatpush2.msra.mxu0 0.0
        %1843 = vmatprep.subr.mxu0 0.0
        %1844 = vmatpush2.msra.mxu0 0.0
        %1845 = vmatprep.subr.mxu0 0.0
        %1846 = vmatpush2.msra.mxu0 0.0
        %1847 = vmatprep.subr.mxu0 0.0
        %1848 = vmatpush2.msra.mxu0 0.0
        %1849 = vmatprep.subr.mxu0 0.0
        %1850 = vmatpush2.msra.mxu0 0.0
        %1851 = vmatprep.subr.mxu0 0.0
        %1852 = vmatpush2.msra.mxu0 0.0
        %1853 = vmatprep.mubr.f32.mxu0 0.0
        %1854 = vmatmul.mubr.f32.gmra.mxu0 %v1787
        %v1855 = vpop.f32.mrf.mxu0
        %v1856 = vadd.f32 %v1784, %v1855
        %v1857 = vpop.f32.mrf.mxu0
        %1858 = vdwg.mxu0
        %v1859 = vadd.f32 %v409, %v1856
        %v1860 = vld [vmem:[%s6] sm:$0x1]
        %v1861 = vld [vmem:[%s7] sm:$0x1]
        %v1862 = vsel %vm412, %v1859, 0.0
        %1863 = vadd.xlane.f32.xlu0 %v1862
        %v1864 = vpop.xlane.xlu0 %1863
        %v1865 = vmul.f32 %v1864, %v416
        %v1866 = vsub.f32 %v1859, %v1865
        %v1867 = vmul.f32 %v1866, %v1866
        %v1868 = vsel %vm412, %v1867, 0.0
        %1869 = vadd.xlane.f32.xlu0 %v1868
        %v1870 = vpop.xlane.xlu0 %1869
        %v1871 = vmul.f32 %v1870, %v416
        %v1872 = vadd.f32 %v1871, 1e-05
        %v1873 = vrsqrt.pop %v1872
        %v1874 = vmul.f32 %v1866, %v1873
        %v1876 = vlaneseq
        %v1877 = vshrl.u32 %v1876, 7
        %v1878 = vsub.s32 0, %v1877
        %v1879 = vrot.slane %v1860, %v1878
        %v1881 = vmul.f32 %v1874, %v1879
        %v1883 = vlaneseq
        %v1884 = vshrl.u32 %v1883, 7
        %v1885 = vsub.s32 0, %v1884
        %v1886 = vrot.slane %v1861, %v1885
        %v1888 = vadd.f32 %v1881, %v1886
        %v1889 = vld [vmem:[%s8] sm:$0xff]
        %v1890 = vld [vmem:[%s8 + $0x8] sm:$0xff]
        %v1891 = vld [vmem:[%s8 + $0x10] sm:$0xff]
        %v1892 = vld [vmem:[%s8 + $0x18] sm:$0xff]
        %v1893 = vld [vmem:[%s9] sm:$0x1]
        %v1895 = vlaneseq
        %v1896 = vshrl.u32 %v1895, 7
        %v1897 = vsub.s32 0, %v1896
        %v1898 = vrot.slane %v1893, %v1897
        %v1901 = vsel %vm412, %v1888, 0
        %1903 = vmatprep.subr.mxu0 0.0
        %1904 = vmatpush1.msra.mxu0 0.0
        %1905 = vmatprep.subr.mxu0 0.0
        %1906 = vmatpush1.msra.mxu0 0.0
        %1907 = vmatprep.subr.mxu0 0.0
        %1908 = vmatpush1.msra.mxu0 0.0
        %1909 = vmatprep.subr.mxu0 0.0
        %1910 = vmatpush1.msra.mxu0 0.0
        %1911 = vmatprep.subr.mxu0 0.0
        %1912 = vmatpush1.msra.mxu0 0.0
        %1913 = vmatprep.subr.mxu0 0.0
        %1914 = vmatpush1.msra.mxu0 0.0
        %1915 = vmatprep.subr.mxu0 0.0
        %1916 = vmatpush1.msra.mxu0 0.0
        %1917 = vmatprep.subr.mxu0 0.0
        %1918 = vmatpush1.msra.mxu0 0.0
        %1919 = vmatprep.subr.mxu0 0.0
        %1920 = vmatpush1.msra.mxu0 0.0
        %1921 = vmatprep.subr.mxu0 0.0
        %1922 = vmatpush1.msra.mxu0 0.0
        %1923 = vmatprep.subr.mxu0 0.0
        %1924 = vmatpush1.msra.mxu0 0.0
        %1925 = vmatprep.subr.mxu0 0.0
        %1926 = vmatpush1.msra.mxu0 0.0
        %1927 = vmatprep.subr.mxu0 0.0
        %1928 = vmatpush1.msra.mxu0 %v1892
        %1929 = vmatprep.subr.mxu0 0.0
        %1930 = vmatpush1.msra.mxu0 %v1891
        %1931 = vmatprep.subr.mxu0 0.0
        %1932 = vmatpush1.msra.mxu0 %v1890
        %1933 = vmatprep.subr.mxu0 0.0
        %1934 = vmatpush1.msra.mxu0 %v1889
        %1935 = vmatprep.subr.mxu0 0.0
        %1936 = vmatpush2.msra.mxu0 0.0
        %1937 = vmatprep.subr.mxu0 0.0
        %1938 = vmatpush2.msra.mxu0 0.0
        %1939 = vmatprep.subr.mxu0 0.0
        %1940 = vmatpush2.msra.mxu0 0.0
        %1941 = vmatprep.subr.mxu0 0.0
        %1942 = vmatpush2.msra.mxu0 0.0
        %1943 = vmatprep.subr.mxu0 0.0
        %1944 = vmatpush2.msra.mxu0 0.0
        %1945 = vmatprep.subr.mxu0 0.0
        %1946 = vmatpush2.msra.mxu0 0.0
        %1947 = vmatprep.subr.mxu0 0.0
        %1948 = vmatpush2.msra.mxu0 0.0
        %1949 = vmatprep.subr.mxu0 0.0
        %1950 = vmatpush2.msra.mxu0 0.0
        %1951 = vmatprep.subr.mxu0 0.0
        %1952 = vmatpush2.msra.mxu0 0.0
        %1953 = vmatprep.subr.mxu0 0.0
        %1954 = vmatpush2.msra.mxu0 0.0
        %1955 = vmatprep.subr.mxu0 0.0
        %1956 = vmatpush2.msra.mxu0 0.0
        %1957 = vmatprep.subr.mxu0 0.0
        %1958 = vmatpush2.msra.mxu0 0.0
        %1959 = vmatprep.subr.mxu0 0.0
        %1960 = vmatpush2.msra.mxu0 0.0
        %1961 = vmatprep.subr.mxu0 0.0
        %1962 = vmatpush2.msra.mxu0 0.0
        %1963 = vmatprep.subr.mxu0 0.0
        %1964 = vmatpush2.msra.mxu0 0.0
        %1965 = vmatprep.subr.mxu0 0.0
        %1966 = vmatpush2.msra.mxu0 0.0
        %1967 = vmatprep.mubr.f32.mxu0 0.0
        %1968 = vmatmul.mubr.f32.gmra.mxu0 %v1901
        %v1969 = vpop.f32.mrf.mxu0
        %v1970 = vadd.f32 %v1898, %v1969
        %v1971 = vpop.f32.mrf.mxu0
        %1972 = vdwg.mxu0
        %v1973 = vmul.f32 %v1970, 0.5
        %v1974 = vmul.f32 %v1970, 0.044715
        %v1975 = vmul.f32 %v1974, %v1970
        %v1976 = vmul.f32 %v1975, %v1970
        %v1977 = vadd.f32 %v1970, %v1976
        %v1978 = vmul.f32 %v1977, 0.7978845
        %v1979 = vtanh.pop %v1978
        %v1980 = vadd.f32 %v1979, 1.0
        %v1981 = vmul.f32 %v1973, %v1980
        %v1982 = vld [vmem:[%s10] sm:$0xff]
        %v1983 = vld [vmem:[%s10 + $0x8] sm:$0xff]
        %v1984 = vld [vmem:[%s10 + $0x10] sm:$0xff]
        %v1985 = vld [vmem:[%s10 + $0x18] sm:$0xff]
        %v1986 = vld [vmem:[%s10 + $0x20] sm:$0xff]
        %v1987 = vld [vmem:[%s10 + $0x28] sm:$0xff]
        %v1988 = vld [vmem:[%s10 + $0x30] sm:$0xff]
        %v1989 = vld [vmem:[%s10 + $0x38] sm:$0xff]
        %v1990 = vld [vmem:[%s10 + $0x40] sm:$0xff]
        %v1991 = vld [vmem:[%s10 + $0x48] sm:$0xff]
        %v1992 = vld [vmem:[%s10 + $0x50] sm:$0xff]
        %v1993 = vld [vmem:[%s10 + $0x58] sm:$0xff]
        %v1994 = vld [vmem:[%s10 + $0x60] sm:$0xff]
        %v1995 = vld [vmem:[%s10 + $0x68] sm:$0xff]
        %v1996 = vld [vmem:[%s10 + $0x70] sm:$0xff]
        %v1997 = vld [vmem:[%s10 + $0x78] sm:$0xff]
        %1998 = vmatprep.subr.mxu0 0.0
        %1999 = vmatpush1.msra.mxu0 %v1997
        %2000 = vmatprep.subr.mxu0 0.0
        %2001 = vmatpush1.msra.mxu0 %v1996
        %2002 = vmatprep.subr.mxu0 0.0
        %2003 = vmatpush1.msra.mxu0 %v1995
        %2004 = vmatprep.subr.mxu0 0.0
        %2005 = vmatpush1.msra.mxu0 %v1994
        %2006 = vmatprep.subr.mxu0 0.0
        %2007 = vmatpush1.msra.mxu0 %v1993
        %2008 = vmatprep.subr.mxu0 0.0
        %2009 = vmatpush1.msra.mxu0 %v1992
        %2010 = vmatprep.subr.mxu0 0.0
        %2011 = vmatpush1.msra.mxu0 %v1991
        %2012 = vmatprep.subr.mxu0 0.0
        %2013 = vmatpush1.msra.mxu0 %v1990
        %2014 = vmatprep.subr.mxu0 0.0
        %2015 = vmatpush1.msra.mxu0 %v1989
        %2016 = vmatprep.subr.mxu0 0.0
        %2017 = vmatpush1.msra.mxu0 %v1988
        %2018 = vmatprep.subr.mxu0 0.0
        %2019 = vmatpush1.msra.mxu0 %v1987
        %2020 = vmatprep.subr.mxu0 0.0
        %2021 = vmatpush1.msra.mxu0 %v1986
        %2022 = vmatprep.subr.mxu0 0.0
        %2023 = vmatpush1.msra.mxu0 %v1985
        %2024 = vmatprep.subr.mxu0 0.0
        %2025 = vmatpush1.msra.mxu0 %v1984
        %2026 = vmatprep.subr.mxu0 0.0
        %2027 = vmatpush1.msra.mxu0 %v1983
        %2028 = vmatprep.subr.mxu0 0.0
        %2029 = vmatpush1.msra.mxu0 %v1982
        %2030 = vmatprep.subr.mxu0 0.0
        %2031 = vmatpush2.msra.mxu0 0.0
        %2032 = vmatprep.subr.mxu0 0.0
        %2033 = vmatpush2.msra.mxu0 0.0
        %2034 = vmatprep.subr.mxu0 0.0
        %2035 = vmatpush2.msra.mxu0 0.0
        %2036 = vmatprep.subr.mxu0 0.0
        %2037 = vmatpush2.msra.mxu0 0.0
        %2038 = vmatprep.subr.mxu0 0.0
        %2039 = vmatpush2.msra.mxu0 0.0
        %2040 = vmatprep.subr.mxu0 0.0
        %2041 = vmatpush2.msra.mxu0 0.0
        %2042 = vmatprep.subr.mxu0 0.0
        %2043 = vmatpush2.msra.mxu0 0.0
        %2044 = vmatprep.subr.mxu0 0.0
        %2045 = vmatpush2.msra.mxu0 0.0
        %2046 = vmatprep.subr.mxu0 0.0
        %2047 = vmatpush2.msra.mxu0 0.0
        %2048 = vmatprep.subr.mxu0 0.0
        %2049 = vmatpush2.msra.mxu0 0.0
        %2050 = vmatprep.subr.mxu0 0.0
        %2051 = vmatpush2.msra.mxu0 0.0
        %2052 = vmatprep.subr.mxu0 0.0
        %2053 = vmatpush2.msra.mxu0 0.0
        %2054 = vmatprep.subr.mxu0 0.0
        %2055 = vmatpush2.msra.mxu0 0.0
        %2056 = vmatprep.subr.mxu0 0.0
        %2057 = vmatpush2.msra.mxu0 0.0
        %2058 = vmatprep.subr.mxu0 0.0
        %2059 = vmatpush2.msra.mxu0 0.0
        %2060 = vmatprep.subr.mxu0 0.0
        %2061 = vmatpush2.msra.mxu0 0.0
        %2062 = vmatprep.mubr.f32.mxu0 0.0
        %2063 = vmatmul.mubr.f32.gmra.mxu0 %v1981
        %v2064 = vpop.f32.mrf.mxu0
        %v2065 = vadd.f32 0.0, %v2064
        %v2066 = vpop.f32.mrf.mxu0
        %2067 = vdwg.mxu0
        %v2068 = vadd.f32 %v1859, %v2065
        %v2069 = vld [vmem:[%s11] sm:$0x1]
        %v2071 = vlaneseq
        %v2072 = vshrl.u32 %v2071, 7
        %v2073 = vsub.s32 0, %v2072
        %v2074 = vrot.slane %v2069, %v2073
        %v2076 = vadd.f32 %v2068, %v2074
        %2077 = vst.msk [vmem:[%s404] sm:$0xff] %vm412, %v2076
        %s2078 = sand.u32 %s291, 1
        %s2079 = scalar_lea.sflag [#allocation4], %s2078
        %s2080 = sand.u32 %s291, 1
        %s2081 = smul.addr %s2080, 8
        %s2082 = scalar_lea.vmem [#allocation3], %s2081
        // Predicated region
        $region69: #{tpu_custom_call.1} parent=67 // pred_check
          %p2083 = pneg %p301
        $region70: #{tpu_custom_call.1} parent=67 // pred_check_branch
          %2085 = sbr.rel (%p2083) target = $region72
        $region71: #{tpu_custom_call.1} parent=67 // pred_region
          %s2087 = ssub.s32 128, 128
          %2088 = vsyncadd %s2079, %s2087
          %s2089 = smul.addr %s26, 128
          %s2090 = scalar_lea.hbm %s12, %s2089
          %s2092 = sshll.u32 %s2082, 4
          %s2093 = int_to_ptr.vmem [resolvable:$true] %s2092
          %2095 = dma.vmem_to_hbm [thread:$0]  %s2093, 128, %s2090, %s2079
        $region72: #{tpu_custom_call.1} parent=67 // pred_fallthru
          _
      $region68: #{tpu_custom_call.1} parent=5 // pred_fallthru
        _
      %p2096 = scmp.le.s32.totalorder 2, %s21
      // Predicated region
      $region73: #{tpu_custom_call.1} parent=5 // pred_check
        %p2097 = pneg %p2096
      $region74: #{tpu_custom_call.1} parent=5 // pred_check_branch
        %2099 = sbr.rel (%p2097) target = $region76
      $region75: #{tpu_custom_call.1} parent=5 // pred_region
        %s2100 = ssub.s32 %s21, 2
        // Predicated region
        $region77: #{tpu_custom_call.1} parent=75 // pred_check
          %p2101 = pneg %p307
        $region78: #{tpu_custom_call.1} parent=75 // pred_check_branch
          %2103 = sbr.rel (%p2101) target = $region80
        $region79: #{tpu_custom_call.1} parent=75 // pred_region
          %s2104 = sand.u32 %s292, 1
          %s2105 = scalar_lea.sflag [#allocation4], %s2104
          %s2106 = sand.u32 %s292, 1
          %s2107 = smul.addr %s2106, 8
          %s2108 = scalar_lea.vmem [#allocation3], %s2107
          %2109 = dma.done %s2105, 128
        $region80: #{tpu_custom_call.1} parent=75 // pred_fallthru
          _
      $region76: #{tpu_custom_call.1} parent=5 // pred_fallthru
        _
    $region6: #{tpu_custom_call.1} parent=1 // loop_footer
      %s25 = sadd.s32 1, %s21
    $region7: #{tpu_custom_call.1} parent=1 // loop_footer_branch
      %20 = sbr.rel target = $region3
    $region8: #{tpu_custom_call.1} parent=1 // loop_exit
      _
    %2110 = vsyncpa [#allocation4], 1
    %s2111 = scalar_lea.sflag [#allocation4], 1
    %2112 = vsyncpa %s2111, 1

</llo_original>
